<compile_context>
chip_gen: v5e
topology: v5e:2x2
jax: 0.10.0
libtpu: 0.0.40
codegen_flags: <defaults>
</compile_context>

<pallas_src>
import jax
import jax.numpy as jnp
from jax.experimental import pallas as pl
from jax.experimental.pallas import tpu as pltpu

HIDDEN_SIZE = 25
INPUT_SIZE = 3
NUM_LAYERS = 1
OUTPUT_SIZE = 3

GP = 128   # gate pitch: each gate's output block padded to a full 128-lane tile
IP = 128   # padded input-feature dim (lane-dense input slab)


# ----------------------------------------------------------------------------
# Pallas kernel
# ----------------------------------------------------------------------------
def _bilstm_kernel(
    x_ref,       # (T*Bp, IP)     time-major, batch- and feature-padded input
    wih_ref,     # (IP, 8*GP)     [fwd i,f,o,g | bwd i,f,o,g] input weights, zero-padded
    b_ref,       # (1, 8*GP)      folded biases (b_ih + b_hh), same layout
    whh_ref,     # (GP, 4*GP)     fused forward recurrent weights, zero-padded
    wfc_f_ref,   # (GP, O)        fc weights acting on the forward hidden
    wfc_b_ref,   # (GP, O)        fc weights acting on the backward hidden
    bfc_ref,     # (1, O)         fc bias
    out_ref,     # (Bp, O)
    pre_ref,     # (T*Bp, 8*GP)   VMEM scratch: precomputed input projections
):
    Bp = out_ref.shape[0]
    T = x_ref.shape[0] // Bp
    gp = whh_ref.shape[0]          # == GP (padded hidden width per gate block)
    g4 = 4 * gp

    # ---- one-shot input projection for all steps / both directions, bias folded ----
    pre_ref[...] = (
        jnp.dot(x_ref[...], wih_ref[...], preferred_element_type=jnp.float32)
        + b_ref[...]
    )

    whh = whh_ref[...]             # hoisted: fused (GP, 4*GP) recurrent weight

    h = jnp.zeros((Bp, gp), jnp.float32)
    c = jnp.zeros((Bp, gp), jnp.float32)

    # ---- forward recurrence, fully unrolled (T is static & tiny) ----
    for t in range(T):
        pre_t = pre_ref[pl.ds(t * Bp, Bp), pl.ds(0, g4)]          # (Bp, 4*GP) fwd half
        gates = pre_t + jnp.dot(h, whh, preferred_element_type=jnp.float32)
        sig = jax.nn.sigmoid(gates[:, 0:3 * gp])                   # [i | f | o] slab
        g_g = jnp.tanh(gates[:, 3 * gp:4 * gp])                    # [g]
        i_g = sig[:, 0:gp]
        f_g = sig[:, gp:2 * gp]
        o_g = sig[:, 2 * gp:3 * gp]
        c = f_g * c + i_g * g_g
        h = o_g * jnp.tanh(c)

    # ---- backward direction: out[:, -1, H:] is the backward LSTM's FIRST step,
    #      i.e. a single cell applied to x[:, -1, :] from the zero state.  Since
    #      h0 == 0 the recurrent matmul vanishes; the input projection was already
    #      produced by the precompute matmul above. ----
    gates_b = pre_ref[pl.ds((T - 1) * Bp, Bp), pl.ds(g4, g4)]      # (Bp, 4*GP) bwd half
    sig_b = jax.nn.sigmoid(gates_b[:, 0:3 * gp])
    g_b = jnp.tanh(gates_b[:, 3 * gp:4 * gp])
    i_b = sig_b[:, 0:gp]
    o_b = sig_b[:, 2 * gp:3 * gp]
    c_b = i_b * g_b                # c0 == 0, so the f_b * c0 term vanishes
    h_b = o_b * jnp.tanh(c_b)

    # ---- fc on concat([h_fwd, h_bwd]) without a lane concat: split-weight two dots ----
    out = (
        jnp.dot(h, wfc_f_ref[...], preferred_element_type=jnp.float32)
        + jnp.dot(h_b, wfc_b_ref[...], preferred_element_type=jnp.float32)
        + bfc_ref[...]
    )
    out_ref[...] = out.astype(out_ref.dtype)


# ----------------------------------------------------------------------------
# Wrapper: parameter re-layout (gate fuse + lane/sublane padding) + pallas_call
# ----------------------------------------------------------------------------
_GATE_ORDER = (0, 1, 3, 2)   # PyTorch gate order is [i, f, g, o]; we pack [i, f, o, g]


def _pack_ih(w_ih, b_ih, b_hh, H, I):
    """(4H, I), (4H,), (4H,) -> (IP, 4*GP) weight and (4*GP,) bias, gate order [i,f,o,g]."""
    w = w_ih.reshape(4, H, I).astype(jnp.float32)
    b = (b_ih + b_hh).reshape(4, H).astype(jnp.float32)
    W = jnp.zeros((IP, 4 * GP), jnp.float32)
    Bv = jnp.zeros((4 * GP,), jnp.float32)
    for slot, g in enumerate(_GATE_ORDER):
        W = W.at[:I, slot * GP:slot * GP + H].set(w[g].T)
        Bv = Bv.at[slot * GP:slot * GP + H].set(b[g])
    return W, Bv


def _pack_hh(w_hh, H):
    """(4H, H) -> (GP, 4*GP) fused recurrent weight, gate order [i,f,o,g], zero-padded."""
    w = w_hh.reshape(4, H, H).astype(jnp.float32)
    W = jnp.zeros((GP, 4 * GP), jnp.float32)
    for slot, g in enumerate(_GATE_ORDER):
        W = W.at[:H, slot * GP:slot * GP + H].set(w[g].T)
    return W


def bilstm_predictor(x, params):
    """x: (B, T, input_size) float32 (PyTorch batch_first). Returns (B, output_size)."""
    (w_ih_f, w_hh_f, b_ih_f, b_hh_f,
     w_ih_b, w_hh_b, b_ih_b, b_hh_b,
     w_fc, b_fc) = params

    B, T, I = x.shape
    H = w_hh_f.shape[1]
    O = w_fc.shape[0]
    assert I <= IP and H <= GP

    Bp = max(8, ((B + 7) // 8) * 8)          # pad batch to full sublane tiles

    # time-major, zero-padded input slab: (T*Bp, IP)
    x_tm = jnp.transpose(x, (1, 0, 2)).astype(jnp.float32)          # (T, B, I)
    x_pad = jnp.zeros((T, Bp, IP), jnp.float32).at[:, :B, :I].set(x_tm)
    x_flat = x_pad.reshape(T * Bp, IP)

    # fused / padded weights (zero padding keeps padded lanes of h, c exactly 0)
    wih_f, bf = _pack_ih(w_ih_f, b_ih_f, b_hh_f, H, I)
    wih_b, bb = _pack_ih(w_ih_b, b_ih_b, b_hh_b, H, I)
    wih_all = jnp.concatenate([wih_f, wih_b], axis=1)               # (IP, 8*GP)
    b_all = jnp.concatenate([bf, bb]).reshape(1, 8 * GP)            # (1, 8*GP)

    whh_f_all = _pack_hh(w_hh_f, H)                                 # (GP, 4*GP)
    # w_hh_b is provably unused: the backward direction contributes only its first
    # step from a zero state, so h0 @ W_hh_b == 0.
    del w_hh_b

    w_fc_f32 = w_fc.astype(jnp.float32)
    wfc_f = jnp.zeros((GP, O), jnp.float32).at[:H, :].set(w_fc_f32[:, :H].T)
    wfc_b = jnp.zeros((GP, O), jnp.float32).at[:H, :].set(w_fc_f32[:, H:].T)
    bfc = b_fc.astype(jnp.float32).reshape(1, O)

    vmem_spec = pl.BlockSpec(memory_space=pltpu.MemorySpace.VMEM)

    out_pad = pl.pallas_call(
        _bilstm_kernel,
        out_shape=jax.ShapeDtypeStruct((Bp, O), jnp.float32),
        in_specs=[vmem_spec] * 7,
        out_specs=vmem_spec,
        scratch_shapes=[pltpu.VMEM((T * Bp, 8 * GP), jnp.float32)],
    )(x_flat, wih_all, b_all, whh_f_all, wfc_f, wfc_b, bfc)

    return out_pad[:B]


# ----------------------------------------------------------------------------
# Pure-JAX reference (full bidirectional LSTM, PyTorch semantics) for sanity check
# ----------------------------------------------------------------------------
def _ref_forward(x, params):
    (w_ih_f, w_hh_f, b_ih_f, b_hh_f,
     w_ih_b, w_hh_b, b_ih_b, b_hh_b,
     w_fc, b_fc) = params
    B, T, _ = x.shape
    H = w_hh_f.shape[1]

    def cell(x_t, h, c, w_ih, w_hh, b_ih, b_hh):
        gates = x_t @ w_ih.T + b_ih + h @ w_hh.T + b_hh
        i, f, g, o = jnp.split(gates, 4, axis=-1)
        i, f, o = jax.nn.sigmoid(i), jax.nn.sigmoid(f), jax.nn.sigmoid(o)
        g = jnp.tanh(g)
        c = f * c + i * g
        h = o * jnp.tanh(c)
        return h, c

    # forward direction
    h = jnp.zeros((B, H), jnp.float32)
    c = jnp.zeros((B, H), jnp.float32)
    fwd_outs = []
    for t in range(T):
        h, c = cell(x[:, t, :], h, c, w_ih_f, w_hh_f, b_ih_f, b_hh_f)
        fwd_outs.append(h)
    # backward direction
    h = jnp.zeros((B, H), jnp.float32)
    c = jnp.zeros((B, H), jnp.float32)
    bwd_outs = [None] * T
    for t in reversed(range(T)):
        h, c = cell(x[:, t, :], h, c, w_ih_b, w_hh_b, b_ih_b, b_hh_b)
        bwd_outs[t] = h
    last = jnp.concatenate([fwd_outs[-1], bwd_outs[-1]], axis=-1)   # out[:, -1, :]
    return last @ w_fc.T + b_fc


# ----------------------------------------------------------------------------
# Deterministic parameter init (PyTorch-style uniform(-1/sqrt(H), 1/sqrt(H)))
# ----------------------------------------------------------------------------
def _init_params(key, input_size, hidden_size, output_size):
    H, I, O = hidden_size, input_size, output_size
    k = 1.0 / jnp.sqrt(jnp.float32(H))
    shapes = [
        (4 * H, I), (4 * H, H), (4 * H,), (4 * H,),   # forward  w_ih, w_hh, b_ih, b_hh
        (4 * H, I), (4 * H, H), (4 * H,), (4 * H,),   # backward w_ih, w_hh, b_ih, b_hh
        (O, 2 * H), (O,),                              # fc weight, fc bias
    ]
    keys = jax.random.split(key, len(shapes))
    return tuple(
        jax.random.uniform(kk, s, jnp.float32, -k, k) for kk, s in zip(keys, shapes)
    )


if __name__ == "__main__":
    key = jax.random.PRNGKey(0)
    k_x, k_p = jax.random.split(key)

    B, T = 2, 8
    x = jax.random.normal(k_x, (B, T, INPUT_SIZE), jnp.float32)
    params = _init_params(k_p, INPUT_SIZE, HIDDEN_SIZE, OUTPUT_SIZE)

    out = bilstm_predictor(x, params)
    out = jax.block_until_ready(out)

    ref = _ref_forward(x, params)
    assert out.shape == (B, OUTPUT_SIZE)
    assert jnp.allclose(out, ref, atol=1e-4, rtol=1e-4), (out, ref)

    print("KERNEL_OK")
</pallas_src>

<mosaic_0001>
module attributes {stable_mosaic.version = 11 : i64} {
  func.func @_bilstm_kernel(%arg0: memref<64x128xf32, #tpu.memory_space<vmem>>, %arg1: memref<128x1024xf32, #tpu.memory_space<vmem>>, %arg2: memref<1x1024xf32, #tpu.memory_space<vmem>>, %arg3: memref<128x512xf32, #tpu.memory_space<vmem>>, %arg4: memref<128x3xf32, #tpu.memory_space<vmem>>, %arg5: memref<128x3xf32, #tpu.memory_space<vmem>>, %arg6: memref<1x3xf32, #tpu.memory_space<vmem>>, %arg7: memref<8x3xf32, #tpu.memory_space<vmem>>, %arg8: memref<64x1024xf32, #tpu.memory_space<vmem>>) attributes {dimension_semantics = [], scalar_prefetch = 0 : i64, scratch_operands = 1 : i64, tpu.core_type = #tpu.core_type<tc>} {
    %c0 = arith.constant 0 : index
    %c0_0 = arith.constant 0 : index
    %0 = vector.load %arg0[%c0, %c0_0] : memref<64x128xf32, #tpu.memory_space<vmem>>, vector<64x128xf32>
    %c0_1 = arith.constant 0 : index
    %c0_2 = arith.constant 0 : index
    %1 = vector.load %arg1[%c0_1, %c0_2] : memref<128x1024xf32, #tpu.memory_space<vmem>>, vector<128x1024xf32>
    %cst = arith.constant dense<0.000000e+00> : vector<64x1024xf32>
    %2 = tpu.matmul %0, %1, %cst {dimension_numbers = #tpu.dot_dimension_numbers<[1], [0], [0], [1], [0, 0, 1, 1], [], []>} : vector<64x128xf32>, vector<128x1024xf32>, vector<64x1024xf32> -> vector<64x1024xf32>
    %c0_3 = arith.constant 0 : index
    %c0_4 = arith.constant 0 : index
    %3 = vector.load %arg2[%c0_3, %c0_4] : memref<1x1024xf32, #tpu.memory_space<vmem>>, vector<1x1024xf32>
    %4 = vector.broadcast %3 : vector<1x1024xf32> to vector<64x1024xf32>
    %5 = arith.addf %2, %4 : vector<64x1024xf32>
    %c0_5 = arith.constant 0 : index
    %c0_6 = arith.constant 0 : index
    %6 = vector.load %arg8[%c0_5, %c0_6] : memref<64x1024xf32, #tpu.memory_space<vmem>>, vector<64x1024xf32>
    tpu.vector_store %arg8[%c0_5, %c0_6], %5 {strides = array<i32>} : memref<64x1024xf32, #tpu.memory_space<vmem>>, vector<64x1024xf32>,
    %c0_7 = arith.constant 0 : index
    %c0_8 = arith.constant 0 : index
    %7 = vector.load %arg3[%c0_7, %c0_8] : memref<128x512xf32, #tpu.memory_space<vmem>>, vector<128x512xf32>
    %cst_9 = arith.constant 0.000000e+00 : f32
    %8 = vector.broadcast %cst_9 : f32 to vector<8x128xf32>
    %cst_10 = arith.constant 0.000000e+00 : f32
    %9 = vector.broadcast %cst_10 : f32 to vector<8x128xf32>
    %c0_11 = arith.constant 0 : index
    %c0_12 = arith.constant 0 : index
    %10 = vector.load %arg8[%c0_11, %c0_12] : memref<64x1024xf32, #tpu.memory_space<vmem>>, vector<8x512xf32>
    %cst_13 = arith.constant dense<0.000000e+00> : vector<8x512xf32>
    %11 = tpu.matmul %8, %7, %cst_13 {dimension_numbers = #tpu.dot_dimension_numbers<[1], [0], [0], [1], [0, 0, 1, 1], [], []>} : vector<8x128xf32>, vector<128x512xf32>, vector<8x512xf32> -> vector<8x512xf32>
    %12 = arith.addf %10, %11 : vector<8x512xf32>
    %13 = vector.extract_strided_slice %12 {offsets = [0, 0], sizes = [8, 384], strides = [1, 1]} : vector<8x512xf32> to vector<8x384xf32>
    %14 = arith.negf %13 : vector<8x384xf32>
    %15 = math.exp %14 : vector<8x384xf32>
    %cst_14 = arith.constant 1.000000e+00 : f32
    %16 = vector.broadcast %cst_14 : f32 to vector<8x384xf32>
    %17 = arith.addf %16, %15 : vector<8x384xf32>
    %18 = arith.divf %16, %17 : vector<8x384xf32>
    %19 = vector.extract_strided_slice %12 {offsets = [0, 384], sizes = [8, 128], strides = [1, 1]} : vector<8x512xf32> to vector<8x128xf32>
    %20 = math.tanh %19 : vector<8x128xf32>
    %21 = vector.extract_strided_slice %18 {offsets = [0, 0], sizes = [8, 128], strides = [1, 1]} : vector<8x384xf32> to vector<8x128xf32>
    %22 = vector.extract_strided_slice %18 {offsets = [0, 128], sizes = [8, 128], strides = [1, 1]} : vector<8x384xf32> to vector<8x128xf32>
    %23 = vector.extract_strided_slice %18 {offsets = [0, 256], sizes = [8, 128], strides = [1, 1]} : vector<8x384xf32> to vector<8x128xf32>
    %24 = arith.mulf %22, %9 : vector<8x128xf32>
    %25 = arith.mulf %21, %20 : vector<8x128xf32>
    %26 = arith.addf %24, %25 : vector<8x128xf32>
    %27 = math.tanh %26 : vector<8x128xf32>
    %28 = arith.mulf %23, %27 : vector<8x128xf32>
    %c8 = arith.constant 8 : index
    %c0_15 = arith.constant 0 : index
    %29 = vector.load %arg8[%c8, %c0_15] : memref<64x1024xf32, #tpu.memory_space<vmem>>, vector<8x512xf32>
    %cst_16 = arith.constant dense<0.000000e+00> : vector<8x512xf32>
    %30 = tpu.matmul %28, %7, %cst_16 {dimension_numbers = #tpu.dot_dimension_numbers<[1], [0], [0], [1], [0, 0, 1, 1], [], []>} : vector<8x128xf32>, vector<128x512xf32>, vector<8x512xf32> -> vector<8x512xf32>
    %31 = arith.addf %29, %30 : vector<8x512xf32>
    %32 = vector.extract_strided_slice %31 {offsets = [0, 0], sizes = [8, 384], strides = [1, 1]} : vector<8x512xf32> to vector<8x384xf32>
    %33 = arith.negf %32 : vector<8x384xf32>
    %34 = math.exp %33 : vector<8x384xf32>
    %cst_17 = arith.constant 1.000000e+00 : f32
    %35 = vector.broadcast %cst_17 : f32 to vector<8x384xf32>
    %36 = arith.addf %35, %34 : vector<8x384xf32>
    %37 = arith.divf %35, %36 : vector<8x384xf32>
    %38 = vector.extract_strided_slice %31 {offsets = [0, 384], sizes = [8, 128], strides = [1, 1]} : vector<8x512xf32> to vector<8x128xf32>
    %39 = math.tanh %38 : vector<8x128xf32>
    %40 = vector.extract_strided_slice %37 {offsets = [0, 0], sizes = [8, 128], strides = [1, 1]} : vector<8x384xf32> to vector<8x128xf32>
    %41 = vector.extract_strided_slice %37 {offsets = [0, 128], sizes = [8, 128], strides = [1, 1]} : vector<8x384xf32> to vector<8x128xf32>
    %42 = vector.extract_strided_slice %37 {offsets = [0, 256], sizes = [8, 128], strides = [1, 1]} : vector<8x384xf32> to vector<8x128xf32>
    %43 = arith.mulf %41, %26 : vector<8x128xf32>
    %44 = arith.mulf %40, %39 : vector<8x128xf32>
    %45 = arith.addf %43, %44 : vector<8x128xf32>
    %46 = math.tanh %45 : vector<8x128xf32>
    %47 = arith.mulf %42, %46 : vector<8x128xf32>
    %c16 = arith.constant 16 : index
    %c0_18 = arith.constant 0 : index
    %48 = vector.load %arg8[%c16, %c0_18] : memref<64x1024xf32, #tpu.memory_space<vmem>>, vector<8x512xf32>
    %cst_19 = arith.constant dense<0.000000e+00> : vector<8x512xf32>
    %49 = tpu.matmul %47, %7, %cst_19 {dimension_numbers = #tpu.dot_dimension_numbers<[1], [0], [0], [1], [0, 0, 1, 1], [], []>} : vector<8x128xf32>, vector<128x512xf32>, vector<8x512xf32> -> vector<8x512xf32>
    %50 = arith.addf %48, %49 : vector<8x512xf32>
    %51 = vector.extract_strided_slice %50 {offsets = [0, 0], sizes = [8, 384], strides = [1, 1]} : vector<8x512xf32> to vector<8x384xf32>
    %52 = arith.negf %51 : vector<8x384xf32>
    %53 = math.exp %52 : vector<8x384xf32>
    %cst_20 = arith.constant 1.000000e+00 : f32
    %54 = vector.broadcast %cst_20 : f32 to vector<8x384xf32>
    %55 = arith.addf %54, %53 : vector<8x384xf32>
    %56 = arith.divf %54, %55 : vector<8x384xf32>
    %57 = vector.extract_strided_slice %50 {offsets = [0, 384], sizes = [8, 128], strides = [1, 1]} : vector<8x512xf32> to vector<8x128xf32>
    %58 = math.tanh %57 : vector<8x128xf32>
    %59 = vector.extract_strided_slice %56 {offsets = [0, 0], sizes = [8, 128], strides = [1, 1]} : vector<8x384xf32> to vector<8x128xf32>
    %60 = vector.extract_strided_slice %56 {offsets = [0, 128], sizes = [8, 128], strides = [1, 1]} : vector<8x384xf32> to vector<8x128xf32>
    %61 = vector.extract_strided_slice %56 {offsets = [0, 256], sizes = [8, 128], strides = [1, 1]} : vector<8x384xf32> to vector<8x128xf32>
    %62 = arith.mulf %60, %45 : vector<8x128xf32>
    %63 = arith.mulf %59, %58 : vector<8x128xf32>
    %64 = arith.addf %62, %63 : vector<8x128xf32>
    %65 = math.tanh %64 : vector<8x128xf32>
    %66 = arith.mulf %61, %65 : vector<8x128xf32>
    %c24 = arith.constant 24 : index
    %c0_21 = arith.constant 0 : index
    %67 = vector.load %arg8[%c24, %c0_21] : memref<64x1024xf32, #tpu.memory_space<vmem>>, vector<8x512xf32>
    %cst_22 = arith.constant dense<0.000000e+00> : vector<8x512xf32>
    %68 = tpu.matmul %66, %7, %cst_22 {dimension_numbers = #tpu.dot_dimension_numbers<[1], [0], [0], [1], [0, 0, 1, 1], [], []>} : vector<8x128xf32>, vector<128x512xf32>, vector<8x512xf32> -> vector<8x512xf32>
    %69 = arith.addf %67, %68 : vector<8x512xf32>
    %70 = vector.extract_strided_slice %69 {offsets = [0, 0], sizes = [8, 384], strides = [1, 1]} : vector<8x512xf32> to vector<8x384xf32>
    %71 = arith.negf %70 : vector<8x384xf32>
    %72 = math.exp %71 : vector<8x384xf32>
    %cst_23 = arith.constant 1.000000e+00 : f32
    %73 = vector.broadcast %cst_23 : f32 to vector<8x384xf32>
    %74 = arith.addf %73, %72 : vector<8x384xf32>
    %75 = arith.divf %73, %74 : vector<8x384xf32>
    %76 = vector.extract_strided_slice %69 {offsets = [0, 384], sizes = [8, 128], strides = [1, 1]} : vector<8x512xf32> to vector<8x128xf32>
    %77 = math.tanh %76 : vector<8x128xf32>
    %78 = vector.extract_strided_slice %75 {offsets = [0, 0], sizes = [8, 128], strides = [1, 1]} : vector<8x384xf32> to vector<8x128xf32>
    %79 = vector.extract_strided_slice %75 {offsets = [0, 128], sizes = [8, 128], strides = [1, 1]} : vector<8x384xf32> to vector<8x128xf32>
    %80 = vector.extract_strided_slice %75 {offsets = [0, 256], sizes = [8, 128], strides = [1, 1]} : vector<8x384xf32> to vector<8x128xf32>
    %81 = arith.mulf %79, %64 : vector<8x128xf32>
    %82 = arith.mulf %78, %77 : vector<8x128xf32>
    %83 = arith.addf %81, %82 : vector<8x128xf32>
    %84 = math.tanh %83 : vector<8x128xf32>
    %85 = arith.mulf %80, %84 : vector<8x128xf32>
    %c32 = arith.constant 32 : index
    %c0_24 = arith.constant 0 : index
    %86 = vector.load %arg8[%c32, %c0_24] : memref<64x1024xf32, #tpu.memory_space<vmem>>, vector<8x512xf32>
    %cst_25 = arith.constant dense<0.000000e+00> : vector<8x512xf32>
    %87 = tpu.matmul %85, %7, %cst_25 {dimension_numbers = #tpu.dot_dimension_numbers<[1], [0], [0], [1], [0, 0, 1, 1], [], []>} : vector<8x128xf32>, vector<128x512xf32>, vector<8x512xf32> -> vector<8x512xf32>
    %88 = arith.addf %86, %87 : vector<8x512xf32>
    %89 = vector.extract_strided_slice %88 {offsets = [0, 0], sizes = [8, 384], strides = [1, 1]} : vector<8x512xf32> to vector<8x384xf32>
    %90 = arith.negf %89 : vector<8x384xf32>
    %91 = math.exp %90 : vector<8x384xf32>
    %cst_26 = arith.constant 1.000000e+00 : f32
    %92 = vector.broadcast %cst_26 : f32 to vector<8x384xf32>
    %93 = arith.addf %92, %91 : vector<8x384xf32>
    %94 = arith.divf %92, %93 : vector<8x384xf32>
    %95 = vector.extract_strided_slice %88 {offsets = [0, 384], sizes = [8, 128], strides = [1, 1]} : vector<8x512xf32> to vector<8x128xf32>
    %96 = math.tanh %95 : vector<8x128xf32>
    %97 = vector.extract_strided_slice %94 {offsets = [0, 0], sizes = [8, 128], strides = [1, 1]} : vector<8x384xf32> to vector<8x128xf32>
    %98 = vector.extract_strided_slice %94 {offsets = [0, 128], sizes = [8, 128], strides = [1, 1]} : vector<8x384xf32> to vector<8x128xf32>
    %99 = vector.extract_strided_slice %94 {offsets = [0, 256], sizes = [8, 128], strides = [1, 1]} : vector<8x384xf32> to vector<8x128xf32>
    %100 = arith.mulf %98, %83 : vector<8x128xf32>
    %101 = arith.mulf %97, %96 : vector<8x128xf32>
    %102 = arith.addf %100, %101 : vector<8x128xf32>
    %103 = math.tanh %102 : vector<8x128xf32>
    %104 = arith.mulf %99, %103 : vector<8x128xf32>
    %c40 = arith.constant 40 : index
    %c0_27 = arith.constant 0 : index
    %105 = vector.load %arg8[%c40, %c0_27] : memref<64x1024xf32, #tpu.memory_space<vmem>>, vector<8x512xf32>
    %cst_28 = arith.constant dense<0.000000e+00> : vector<8x512xf32>
    %106 = tpu.matmul %104, %7, %cst_28 {dimension_numbers = #tpu.dot_dimension_numbers<[1], [0], [0], [1], [0, 0, 1, 1], [], []>} : vector<8x128xf32>, vector<128x512xf32>, vector<8x512xf32> -> vector<8x512xf32>
    %107 = arith.addf %105, %106 : vector<8x512xf32>
    %108 = vector.extract_strided_slice %107 {offsets = [0, 0], sizes = [8, 384], strides = [1, 1]} : vector<8x512xf32> to vector<8x384xf32>
    %109 = arith.negf %108 : vector<8x384xf32>
    %110 = math.exp %109 : vector<8x384xf32>
    %cst_29 = arith.constant 1.000000e+00 : f32
    %111 = vector.broadcast %cst_29 : f32 to vector<8x384xf32>
    %112 = arith.addf %111, %110 : vector<8x384xf32>
    %113 = arith.divf %111, %112 : vector<8x384xf32>
    %114 = vector.extract_strided_slice %107 {offsets = [0, 384], sizes = [8, 128], strides = [1, 1]} : vector<8x512xf32> to vector<8x128xf32>
    %115 = math.tanh %114 : vector<8x128xf32>
    %116 = vector.extract_strided_slice %113 {offsets = [0, 0], sizes = [8, 128], strides = [1, 1]} : vector<8x384xf32> to vector<8x128xf32>
    %117 = vector.extract_strided_slice %113 {offsets = [0, 128], sizes = [8, 128], strides = [1, 1]} : vector<8x384xf32> to vector<8x128xf32>
    %118 = vector.extract_strided_slice %113 {offsets = [0, 256], sizes = [8, 128], strides = [1, 1]} : vector<8x384xf32> to vector<8x128xf32>
    %119 = arith.mulf %117, %102 : vector<8x128xf32>
    %120 = arith.mulf %116, %115 : vector<8x128xf32>
    %121 = arith.addf %119, %120 : vector<8x128xf32>
    %122 = math.tanh %121 : vector<8x128xf32>
    %123 = arith.mulf %118, %122 : vector<8x128xf32>
    %c48 = arith.constant 48 : index
    %c0_30 = arith.constant 0 : index
    %124 = vector.load %arg8[%c48, %c0_30] : memref<64x1024xf32, #tpu.memory_space<vmem>>, vector<8x512xf32>
    %cst_31 = arith.constant dense<0.000000e+00> : vector<8x512xf32>
    %125 = tpu.matmul %123, %7, %cst_31 {dimension_numbers = #tpu.dot_dimension_numbers<[1], [0], [0], [1], [0, 0, 1, 1], [], []>} : vector<8x128xf32>, vector<128x512xf32>, vector<8x512xf32> -> vector<8x512xf32>
    %126 = arith.addf %124, %125 : vector<8x512xf32>
    %127 = vector.extract_strided_slice %126 {offsets = [0, 0], sizes = [8, 384], strides = [1, 1]} : vector<8x512xf32> to vector<8x384xf32>
    %128 = arith.negf %127 : vector<8x384xf32>
    %129 = math.exp %128 : vector<8x384xf32>
    %cst_32 = arith.constant 1.000000e+00 : f32
    %130 = vector.broadcast %cst_32 : f32 to vector<8x384xf32>
    %131 = arith.addf %130, %129 : vector<8x384xf32>
    %132 = arith.divf %130, %131 : vector<8x384xf32>
    %133 = vector.extract_strided_slice %126 {offsets = [0, 384], sizes = [8, 128], strides = [1, 1]} : vector<8x512xf32> to vector<8x128xf32>
    %134 = math.tanh %133 : vector<8x128xf32>
    %135 = vector.extract_strided_slice %132 {offsets = [0, 0], sizes = [8, 128], strides = [1, 1]} : vector<8x384xf32> to vector<8x128xf32>
    %136 = vector.extract_strided_slice %132 {offsets = [0, 128], sizes = [8, 128], strides = [1, 1]} : vector<8x384xf32> to vector<8x128xf32>
    %137 = vector.extract_strided_slice %132 {offsets = [0, 256], sizes = [8, 128], strides = [1, 1]} : vector<8x384xf32> to vector<8x128xf32>
    %138 = arith.mulf %136, %121 : vector<8x128xf32>
    %139 = arith.mulf %135, %134 : vector<8x128xf32>
    %140 = arith.addf %138, %139 : vector<8x128xf32>
    %141 = math.tanh %140 : vector<8x128xf32>
    %142 = arith.mulf %137, %141 : vector<8x128xf32>
    %c56 = arith.constant 56 : index
    %c0_33 = arith.constant 0 : index
    %143 = vector.load %arg8[%c56, %c0_33] : memref<64x1024xf32, #tpu.memory_space<vmem>>, vector<8x512xf32>
    %cst_34 = arith.constant dense<0.000000e+00> : vector<8x512xf32>
    %144 = tpu.matmul %142, %7, %cst_34 {dimension_numbers = #tpu.dot_dimension_numbers<[1], [0], [0], [1], [0, 0, 1, 1], [], []>} : vector<8x128xf32>, vector<128x512xf32>, vector<8x512xf32> -> vector<8x512xf32>
    %145 = arith.addf %143, %144 : vector<8x512xf32>
    %146 = vector.extract_strided_slice %145 {offsets = [0, 0], sizes = [8, 384], strides = [1, 1]} : vector<8x512xf32> to vector<8x384xf32>
    %147 = arith.negf %146 : vector<8x384xf32>
    %148 = math.exp %147 : vector<8x384xf32>
    %cst_35 = arith.constant 1.000000e+00 : f32
    %149 = vector.broadcast %cst_35 : f32 to vector<8x384xf32>
    %150 = arith.addf %149, %148 : vector<8x384xf32>
    %151 = arith.divf %149, %150 : vector<8x384xf32>
    %152 = vector.extract_strided_slice %145 {offsets = [0, 384], sizes = [8, 128], strides = [1, 1]} : vector<8x512xf32> to vector<8x128xf32>
    %153 = math.tanh %152 : vector<8x128xf32>
    %154 = vector.extract_strided_slice %151 {offsets = [0, 0], sizes = [8, 128], strides = [1, 1]} : vector<8x384xf32> to vector<8x128xf32>
    %155 = vector.extract_strided_slice %151 {offsets = [0, 128], sizes = [8, 128], strides = [1, 1]} : vector<8x384xf32> to vector<8x128xf32>
    %156 = vector.extract_strided_slice %151 {offsets = [0, 256], sizes = [8, 128], strides = [1, 1]} : vector<8x384xf32> to vector<8x128xf32>
    %157 = arith.mulf %155, %140 : vector<8x128xf32>
    %158 = arith.mulf %154, %153 : vector<8x128xf32>
    %159 = arith.addf %157, %158 : vector<8x128xf32>
    %160 = math.tanh %159 : vector<8x128xf32>
    %161 = arith.mulf %156, %160 : vector<8x128xf32>
    %c56_36 = arith.constant 56 : index
    %c512 = arith.constant 512 : index
    %162 = vector.load %arg8[%c56_36, %c512] : memref<64x1024xf32, #tpu.memory_space<vmem>>, vector<8x512xf32>
    %163 = vector.extract_strided_slice %162 {offsets = [0, 0], sizes = [8, 384], strides = [1, 1]} : vector<8x512xf32> to vector<8x384xf32>
    %164 = arith.negf %163 : vector<8x384xf32>
    %165 = math.exp %164 : vector<8x384xf32>
    %cst_37 = arith.constant 1.000000e+00 : f32
    %166 = vector.broadcast %cst_37 : f32 to vector<8x384xf32>
    %167 = arith.addf %166, %165 : vector<8x384xf32>
    %168 = arith.divf %166, %167 : vector<8x384xf32>
    %169 = vector.extract_strided_slice %162 {offsets = [0, 384], sizes = [8, 128], strides = [1, 1]} : vector<8x512xf32> to vector<8x128xf32>
    %170 = math.tanh %169 : vector<8x128xf32>
    %171 = vector.extract_strided_slice %168 {offsets = [0, 0], sizes = [8, 128], strides = [1, 1]} : vector<8x384xf32> to vector<8x128xf32>
    %172 = vector.extract_strided_slice %168 {offsets = [0, 256], sizes = [8, 128], strides = [1, 1]} : vector<8x384xf32> to vector<8x128xf32>
    %173 = arith.mulf %171, %170 : vector<8x128xf32>
    %174 = math.tanh %173 : vector<8x128xf32>
    %175 = arith.mulf %172, %174 : vector<8x128xf32>
    %c0_38 = arith.constant 0 : index
    %c0_39 = arith.constant 0 : index
    %176 = vector.load %arg4[%c0_38, %c0_39] : memref<128x3xf32, #tpu.memory_space<vmem>>, vector<128x3xf32>
    %cst_40 = arith.constant dense<0.000000e+00> : vector<8x3xf32>
    %177 = tpu.matmul %161, %176, %cst_40 {dimension_numbers = #tpu.dot_dimension_numbers<[1], [0], [0], [1], [0, 0, 1, 1], [], []>} : vector<8x128xf32>, vector<128x3xf32>, vector<8x3xf32> -> vector<8x3xf32>
    %c0_41 = arith.constant 0 : index
    %c0_42 = arith.constant 0 : index
    %178 = vector.load %arg5[%c0_41, %c0_42] : memref<128x3xf32, #tpu.memory_space<vmem>>, vector<128x3xf32>
    %cst_43 = arith.constant dense<0.000000e+00> : vector<8x3xf32>
    %179 = tpu.matmul %175, %178, %cst_43 {dimension_numbers = #tpu.dot_dimension_numbers<[1], [0], [0], [1], [0, 0, 1, 1], [], []>} : vector<8x128xf32>, vector<128x3xf32>, vector<8x3xf32> -> vector<8x3xf32>
    %180 = arith.addf %177, %179 : vector<8x3xf32>
    %c0_44 = arith.constant 0 : index
    %c0_45 = arith.constant 0 : index
    %181 = vector.load %arg6[%c0_44, %c0_45] : memref<1x3xf32, #tpu.memory_space<vmem>>, vector<1x3xf32>
    %182 = vector.broadcast %181 : vector<1x3xf32> to vector<8x3xf32>
    %183 = arith.addf %180, %182 : vector<8x3xf32>
    %c0_46 = arith.constant 0 : index
    %c0_47 = arith.constant 0 : index
    %184 = vector.load %arg7[%c0_46, %c0_47] : memref<8x3xf32, #tpu.memory_space<vmem>>, vector<8x3xf32>
    tpu.vector_store %arg7[%c0_46, %c0_47], %183 {strides = array<i32>} : memref<8x3xf32, #tpu.memory_space<vmem>>, vector<8x3xf32>,
    return
  }
}

</mosaic_0001>

<llo_original>
// kernel: tpu_custom_call.1
$region0: #{tpu_custom_call.1}
  #allocation0 [shape = 'u32[]', space=smem, size = 0x4, offset = 0x4, fixed_abs, tag = 'smem constant byte address 0x4 - core index']
  #allocation1 [shape = 'u32[72,128]{1,0:T(1,128)}', space=vmem, size = 0x9000, scoped, tag = 'internal scratch']
  #allocation2 [shape = 'f32[64,1024]{1,0:T(8,128)}', space=vmem, size = 0x40000, scoped, tag = 'scratch operand']
  %s0 = inlined_call_operand.vmem [shape: f32[64,128], index: 0, kind: input, shape index: {}]
  %s1 = inlined_call_operand.hbm [shape: f32[128,1024], index: 1, kind: input, shape index: {}]
  %s2 = inlined_call_operand.vmem [shape: f32[1,1024], index: 2, kind: input, shape index: {}]
  %s3 = inlined_call_operand.hbm [shape: f32[128,512], index: 3, kind: input, shape index: {}]
  %s4 = inlined_call_operand.vmem [shape: f32[128,3], index: 4, kind: input, shape index: {}]
  %s5 = inlined_call_operand.vmem [shape: f32[128,3], index: 5, kind: input, shape index: {}]
  %s6 = inlined_call_operand.vmem [shape: f32[1,3], index: 6, kind: input, shape index: {}]
  %s7 = inlined_call_operand.vmem [shape: f32[8,3], index: 7, kind: output, shape index: {}]
  %s8 = sld [smem:[#allocation0]]
  $region46: #{tpu_custom_call.1} parent=0
    _
  %s10 = ssub.s32 1, %s8
  %s11 = scalar_select 0, %s10, %s8
  $region1: #{tpu_custom_call.1} parent=0
    #allocation3 [shape = 'u8[524288]{0}', space=vmem, size = 0x80000, scoped, tag = 'input window, operand 1, single buffered']
    #allocation4 [shape = 's32[1]{0}', space=sflag, size = 0x4, scoped, tag = 'scoped memory for tpu_custom_call.1']
    #allocation5 [shape = 'u8[262144]{0}', space=vmem, size = 0x40000, scoped, tag = 'input window, operand 3, single buffered']
    #allocation6 [shape = 's32[1]{0}', space=sflag, size = 0x4, scoped, tag = 'scoped memory for tpu_custom_call.1']
    %12 = vsyncpa [#allocation4], 0
    %13 = vsyncpa [#allocation6], 0
    // Predicated region
    $region2: #{tpu_custom_call.1} parent=1 // pred_check
      _
    $region3: #{tpu_custom_call.1} parent=1 // pred_check_branch
      %15 = sbr.rel (0) target = $region5
    $region4: #{tpu_custom_call.1} parent=1 // pred_region
      _
    $region5: #{tpu_custom_call.1} parent=1 // pred_fallthru
      _
    // Predicated region
    $region6: #{tpu_custom_call.1} parent=1 // pred_check
      _
    $region7: #{tpu_custom_call.1} parent=1 // pred_check_branch
      %17 = sbr.rel (0) target = $region9
    $region8: #{tpu_custom_call.1} parent=1 // pred_region
      %19 = vsyncadd [#allocation4], 0
      %s20 = sshll.u32 %s1, 4
      %s21 = int_to_ptr.hbm [resolvable:$true] %s20
      %s22 = sshll.u32 [#allocation3], 4
      %s23 = int_to_ptr.vmem [resolvable:$true] %s22
      %28 = dma.hbm_to_vmem [thread:$0]  %s21, 16384, %s23, [#allocation4], 1024, 1024, 64
    $region9: #{tpu_custom_call.1} parent=1 // pred_fallthru
      _
    // Predicated region
    $region10: #{tpu_custom_call.1} parent=1 // pred_check
      _
    $region11: #{tpu_custom_call.1} parent=1 // pred_check_branch
      %30 = sbr.rel (0) target = $region13
    $region12: #{tpu_custom_call.1} parent=1 // pred_region
      _
    $region13: #{tpu_custom_call.1} parent=1 // pred_fallthru
      _
    // Predicated region
    $region14: #{tpu_custom_call.1} parent=1 // pred_check
      _
    $region15: #{tpu_custom_call.1} parent=1 // pred_check_branch
      %32 = sbr.rel (0) target = $region17
    $region16: #{tpu_custom_call.1} parent=1 // pred_region
      %34 = vsyncadd [#allocation6], 0
      %s35 = sshll.u32 %s3, 4
      %s36 = int_to_ptr.hbm [resolvable:$true] %s35
      %s37 = sshll.u32 [#allocation5], 4
      %s38 = int_to_ptr.vmem [resolvable:$true] %s37
      %43 = dma.hbm_to_vmem [thread:$0]  %s36, 8192, %s38, [#allocation6], 512, 512, 32
    $region17: #{tpu_custom_call.1} parent=1 // pred_fallthru
      _
    // Predicated region
    $region18: #{tpu_custom_call.1} parent=1 // pred_check
      _
    $region19: #{tpu_custom_call.1} parent=1 // pred_check_branch
      %45 = sbr.rel (0) target = $region21
    $region20: #{tpu_custom_call.1} parent=1 // pred_region
      _
    $region21: #{tpu_custom_call.1} parent=1 // pred_fallthru
      _
    // Predicated region
    $region22: #{tpu_custom_call.1} parent=1 // pred_check
      _
    $region23: #{tpu_custom_call.1} parent=1 // pred_check_branch
      %47 = sbr.rel (0) target = $region25
    $region24: #{tpu_custom_call.1} parent=1 // pred_region
      _
    $region25: #{tpu_custom_call.1} parent=1 // pred_fallthru
      _
    // Predicated region
    $region26: #{tpu_custom_call.1} parent=1 // pred_check
      _
    $region27: #{tpu_custom_call.1} parent=1 // pred_check_branch
      %49 = sbr.rel (0) target = $region29
    $region28: #{tpu_custom_call.1} parent=1 // pred_region
      _
    $region29: #{tpu_custom_call.1} parent=1 // pred_fallthru
      _
    // Predicated region
    $region30: #{tpu_custom_call.1} parent=1 // pred_check
      _
    $region31: #{tpu_custom_call.1} parent=1 // pred_check_branch
      %51 = sbr.rel (0) target = $region33
    $region32: #{tpu_custom_call.1} parent=1 // pred_region
      %53 = dma.done [#allocation4], 16384
    $region33: #{tpu_custom_call.1} parent=1 // pred_fallthru
      _
    // Predicated region
    $region34: #{tpu_custom_call.1} parent=1 // pred_check
      _
    $region35: #{tpu_custom_call.1} parent=1 // pred_check_branch
      %55 = sbr.rel (0) target = $region37
    $region36: #{tpu_custom_call.1} parent=1 // pred_region
      %57 = dma.done [#allocation6], 8192
    $region37: #{tpu_custom_call.1} parent=1 // pred_fallthru
      _
    %v58 = vld [vmem:[%s0] sm:$0xff]
    %v59 = vld [vmem:[%s0 + $0x8] sm:$0xff]
    %v60 = vld [vmem:[%s0 + $0x10] sm:$0xff]
    %v61 = vld [vmem:[%s0 + $0x18] sm:$0xff]
    %v62 = vld [vmem:[%s0 + $0x20] sm:$0xff]
    %v63 = vld [vmem:[%s0 + $0x28] sm:$0xff]
    %v64 = vld [vmem:[%s0 + $0x30] sm:$0xff]
    %v65 = vld [vmem:[%s0 + $0x38] sm:$0xff]
    %v66 = vld [vmem:[#allocation3] sm:$0xff]
    %v67 = vld [vmem:[#allocation3 + $0x8] sm:$0xff]
    %v68 = vld [vmem:[#allocation3 + $0x10] sm:$0xff]
    %v69 = vld [vmem:[#allocation3 + $0x18] sm:$0xff]
    %v70 = vld [vmem:[#allocation3 + $0x20] sm:$0xff]
    %v71 = vld [vmem:[#allocation3 + $0x28] sm:$0xff]
    %v72 = vld [vmem:[#allocation3 + $0x30] sm:$0xff]
    %v73 = vld [vmem:[#allocation3 + $0x38] sm:$0xff]
    %v74 = vld [vmem:[#allocation3 + $0x40] sm:$0xff]
    %v75 = vld [vmem:[#allocation3 + $0x48] sm:$0xff]
    %v76 = vld [vmem:[#allocation3 + $0x50] sm:$0xff]
    %v77 = vld [vmem:[#allocation3 + $0x58] sm:$0xff]
    %v78 = vld [vmem:[#allocation3 + $0x60] sm:$0xff]
    %v79 = vld [vmem:[#allocation3 + $0x68] sm:$0xff]
    %v80 = vld [vmem:[#allocation3 + $0x70] sm:$0xff]
    %v81 = vld [vmem:[#allocation3 + $0x78] sm:$0xff]
    %v82 = vld [vmem:[#allocation3 + $0x80] sm:$0xff]
    %v83 = vld [vmem:[#allocation3 + $0x88] sm:$0xff]
    %v84 = vld [vmem:[#allocation3 + $0x90] sm:$0xff]
    %v85 = vld [vmem:[#allocation3 + $0x98] sm:$0xff]
    %v86 = vld [vmem:[#allocation3 + $0xa0] sm:$0xff]
    %v87 = vld [vmem:[#allocation3 + $0xa8] sm:$0xff]
    %v88 = vld [vmem:[#allocation3 + $0xb0] sm:$0xff]
    %v89 = vld [vmem:[#allocation3 + $0xb8] sm:$0xff]
    %v90 = vld [vmem:[#allocation3 + $0xc0] sm:$0xff]
    %v91 = vld [vmem:[#allocation3 + $0xc8] sm:$0xff]
    %v92 = vld [vmem:[#allocation3 + $0xd0] sm:$0xff]
    %v93 = vld [vmem:[#allocation3 + $0xd8] sm:$0xff]
    %v94 = vld [vmem:[#allocation3 + $0xe0] sm:$0xff]
    %v95 = vld [vmem:[#allocation3 + $0xe8] sm:$0xff]
    %v96 = vld [vmem:[#allocation3 + $0xf0] sm:$0xff]
    %v97 = vld [vmem:[#allocation3 + $0xf8] sm:$0xff]
    %v98 = vld [vmem:[#allocation3 + $0x100] sm:$0xff]
    %v99 = vld [vmem:[#allocation3 + $0x108] sm:$0xff]
    %v100 = vld [vmem:[#allocation3 + $0x110] sm:$0xff]
    %v101 = vld [vmem:[#allocation3 + $0x118] sm:$0xff]
    %v102 = vld [vmem:[#allocation3 + $0x120] sm:$0xff]
    %v103 = vld [vmem:[#allocation3 + $0x128] sm:$0xff]
    %v104 = vld [vmem:[#allocation3 + $0x130] sm:$0xff]
    %v105 = vld [vmem:[#allocation3 + $0x138] sm:$0xff]
    %v106 = vld [vmem:[#allocation3 + $0x140] sm:$0xff]
    %v107 = vld [vmem:[#allocation3 + $0x148] sm:$0xff]
    %v108 = vld [vmem:[#allocation3 + $0x150] sm:$0xff]
    %v109 = vld [vmem:[#allocation3 + $0x158] sm:$0xff]
    %v110 = vld [vmem:[#allocation3 + $0x160] sm:$0xff]
    %v111 = vld [vmem:[#allocation3 + $0x168] sm:$0xff]
    %v112 = vld [vmem:[#allocation3 + $0x170] sm:$0xff]
    %v113 = vld [vmem:[#allocation3 + $0x178] sm:$0xff]
    %v114 = vld [vmem:[#allocation3 + $0x180] sm:$0xff]
    %v115 = vld [vmem:[#allocation3 + $0x188] sm:$0xff]
    %v116 = vld [vmem:[#allocation3 + $0x190] sm:$0xff]
    %v117 = vld [vmem:[#allocation3 + $0x198] sm:$0xff]
    %v118 = vld [vmem:[#allocation3 + $0x1a0] sm:$0xff]
    %v119 = vld [vmem:[#allocation3 + $0x1a8] sm:$0xff]
    %v120 = vld [vmem:[#allocation3 + $0x1b0] sm:$0xff]
    %v121 = vld [vmem:[#allocation3 + $0x1b8] sm:$0xff]
    %v122 = vld [vmem:[#allocation3 + $0x1c0] sm:$0xff]
    %v123 = vld [vmem:[#allocation3 + $0x1c8] sm:$0xff]
    %v124 = vld [vmem:[#allocation3 + $0x1d0] sm:$0xff]
    %v125 = vld [vmem:[#allocation3 + $0x1d8] sm:$0xff]
    %v126 = vld [vmem:[#allocation3 + $0x1e0] sm:$0xff]
    %v127 = vld [vmem:[#allocation3 + $0x1e8] sm:$0xff]
    %v128 = vld [vmem:[#allocation3 + $0x1f0] sm:$0xff]
    %v129 = vld [vmem:[#allocation3 + $0x1f8] sm:$0xff]
    %v130 = vld [vmem:[#allocation3 + $0x200] sm:$0xff]
    %v131 = vld [vmem:[#allocation3 + $0x208] sm:$0xff]
    %v132 = vld [vmem:[#allocation3 + $0x210] sm:$0xff]
    %v133 = vld [vmem:[#allocation3 + $0x218] sm:$0xff]
    %v134 = vld [vmem:[#allocation3 + $0x220] sm:$0xff]
    %v135 = vld [vmem:[#allocation3 + $0x228] sm:$0xff]
    %v136 = vld [vmem:[#allocation3 + $0x230] sm:$0xff]
    %v137 = vld [vmem:[#allocation3 + $0x238] sm:$0xff]
    %v138 = vld [vmem:[#allocation3 + $0x240] sm:$0xff]
    %v139 = vld [vmem:[#allocation3 + $0x248] sm:$0xff]
    %v140 = vld [vmem:[#allocation3 + $0x250] sm:$0xff]
    %v141 = vld [vmem:[#allocation3 + $0x258] sm:$0xff]
    %v142 = vld [vmem:[#allocation3 + $0x260] sm:$0xff]
    %v143 = vld [vmem:[#allocation3 + $0x268] sm:$0xff]
    %v144 = vld [vmem:[#allocation3 + $0x270] sm:$0xff]
    %v145 = vld [vmem:[#allocation3 + $0x278] sm:$0xff]
    %v146 = vld [vmem:[#allocation3 + $0x280] sm:$0xff]
    %v147 = vld [vmem:[#allocation3 + $0x288] sm:$0xff]
    %v148 = vld [vmem:[#allocation3 + $0x290] sm:$0xff]
    %v149 = vld [vmem:[#allocation3 + $0x298] sm:$0xff]
    %v150 = vld [vmem:[#allocation3 + $0x2a0] sm:$0xff]
    %v151 = vld [vmem:[#allocation3 + $0x2a8] sm:$0xff]
    %v152 = vld [vmem:[#allocation3 + $0x2b0] sm:$0xff]
    %v153 = vld [vmem:[#allocation3 + $0x2b8] sm:$0xff]
    %v154 = vld [vmem:[#allocation3 + $0x2c0] sm:$0xff]
    %v155 = vld [vmem:[#allocation3 + $0x2c8] sm:$0xff]
    %v156 = vld [vmem:[#allocation3 + $0x2d0] sm:$0xff]
    %v157 = vld [vmem:[#allocation3 + $0x2d8] sm:$0xff]
    %v158 = vld [vmem:[#allocation3 + $0x2e0] sm:$0xff]
    %v159 = vld [vmem:[#allocation3 + $0x2e8] sm:$0xff]
    %v160 = vld [vmem:[#allocation3 + $0x2f0] sm:$0xff]
    %v161 = vld [vmem:[#allocation3 + $0x2f8] sm:$0xff]
    %v162 = vld [vmem:[#allocation3 + $0x300] sm:$0xff]
    %v163 = vld [vmem:[#allocation3 + $0x308] sm:$0xff]
    %v164 = vld [vmem:[#allocation3 + $0x310] sm:$0xff]
    %v165 = vld [vmem:[#allocation3 + $0x318] sm:$0xff]
    %v166 = vld [vmem:[#allocation3 + $0x320] sm:$0xff]
    %v167 = vld [vmem:[#allocation3 + $0x328] sm:$0xff]
    %v168 = vld [vmem:[#allocation3 + $0x330] sm:$0xff]
    %v169 = vld [vmem:[#allocation3 + $0x338] sm:$0xff]
    %v170 = vld [vmem:[#allocation3 + $0x340] sm:$0xff]
    %v171 = vld [vmem:[#allocation3 + $0x348] sm:$0xff]
    %v172 = vld [vmem:[#allocation3 + $0x350] sm:$0xff]
    %v173 = vld [vmem:[#allocation3 + $0x358] sm:$0xff]
    %v174 = vld [vmem:[#allocation3 + $0x360] sm:$0xff]
    %v175 = vld [vmem:[#allocation3 + $0x368] sm:$0xff]
    %v176 = vld [vmem:[#allocation3 + $0x370] sm:$0xff]
    %v177 = vld [vmem:[#allocation3 + $0x378] sm:$0xff]
    %v178 = vld [vmem:[#allocation3 + $0x380] sm:$0xff]
    %v179 = vld [vmem:[#allocation3 + $0x388] sm:$0xff]
    %v180 = vld [vmem:[#allocation3 + $0x390] sm:$0xff]
    %v181 = vld [vmem:[#allocation3 + $0x398] sm:$0xff]
    %v182 = vld [vmem:[#allocation3 + $0x3a0] sm:$0xff]
    %v183 = vld [vmem:[#allocation3 + $0x3a8] sm:$0xff]
    %v184 = vld [vmem:[#allocation3 + $0x3b0] sm:$0xff]
    %v185 = vld [vmem:[#allocation3 + $0x3b8] sm:$0xff]
    %v186 = vld [vmem:[#allocation3 + $0x3c0] sm:$0xff]
    %v187 = vld [vmem:[#allocation3 + $0x3c8] sm:$0xff]
    %v188 = vld [vmem:[#allocation3 + $0x3d0] sm:$0xff]
    %v189 = vld [vmem:[#allocation3 + $0x3d8] sm:$0xff]
    %v190 = vld [vmem:[#allocation3 + $0x3e0] sm:$0xff]
    %v191 = vld [vmem:[#allocation3 + $0x3e8] sm:$0xff]
    %v192 = vld [vmem:[#allocation3 + $0x3f0] sm:$0xff]
    %v193 = vld [vmem:[#allocation3 + $0x3f8] sm:$0xff]
    %v194 = vld [vmem:[%s2] sm:$0xff]
    %v196 = vperm.slane %v194, 0
    %v197 = vperm.slane %v194, 1
    %v198 = vperm.slane %v194, 2
    %v199 = vperm.slane %v194, 3
    %v200 = vperm.slane %v194, 4
    %v201 = vperm.slane %v194, 5
    %v202 = vperm.slane %v194, 6
    %v203 = vperm.slane %v194, 7
    %212 = vmatpush.msra.mxu0 %v186
    %213 = vmatpush.msra.mxu0 %v178
    %214 = vmatpush.msra.mxu0 %v170
    %215 = vmatpush.msra.mxu0 %v162
    %216 = vmatpush.msra.mxu0 %v154
    %217 = vmatpush.msra.mxu0 %v146
    %218 = vmatpush.msra.mxu0 %v138
    %219 = vmatpush.msra.mxu0 %v130
    %220 = vmatpush.msra.mxu0 %v122
    %221 = vmatpush.msra.mxu0 %v114
    %222 = vmatpush.msra.mxu0 %v106
    %223 = vmatpush.msra.mxu0 %v98
    %224 = vmatpush.msra.mxu0 %v90
    %225 = vmatpush.msra.mxu0 %v82
    %226 = vmatpush.msra.mxu0 %v74
    %227 = vmatpush.msra.mxu0 %v66
    %228 = vmatmul.f32.gmra.mxu0 %v58
    %v229 = vpop.f32.mrf.mxu0
    %v230 = vadd.f32 %v196, %v229
    %231 = vmatmul.f32.gmra.mxu0 %v59
    %v232 = vpop.f32.mrf.mxu0
    %v233 = vadd.f32 %v196, %v232
    %234 = vmatmul.f32.gmra.mxu0 %v60
    %v235 = vpop.f32.mrf.mxu0
    %v236 = vadd.f32 %v196, %v235
    %237 = vmatmul.f32.gmra.mxu0 %v61
    %v238 = vpop.f32.mrf.mxu0
    %v239 = vadd.f32 %v196, %v238
    %240 = vmatmul.f32.gmra.mxu0 %v62
    %v241 = vpop.f32.mrf.mxu0
    %v242 = vadd.f32 %v196, %v241
    %243 = vmatmul.f32.gmra.mxu0 %v63
    %v244 = vpop.f32.mrf.mxu0
    %v245 = vadd.f32 %v196, %v244
    %246 = vmatmul.f32.gmra.mxu0 %v64
    %v247 = vpop.f32.mrf.mxu0
    %v248 = vadd.f32 %v196, %v247
    %249 = vmatmul.f32.gmra.mxu0 %v65
    %v250 = vpop.f32.mrf.mxu0
    %v251 = vadd.f32 %v196, %v250
    %252 = vdwg.mxu0
    %253 = vmatpush.msra.mxu0 %v187
    %254 = vmatpush.msra.mxu0 %v179
    %255 = vmatpush.msra.mxu0 %v171
    %256 = vmatpush.msra.mxu0 %v163
    %257 = vmatpush.msra.mxu0 %v155
    %258 = vmatpush.msra.mxu0 %v147
    %259 = vmatpush.msra.mxu0 %v139
    %260 = vmatpush.msra.mxu0 %v131
    %261 = vmatpush.msra.mxu0 %v123
    %262 = vmatpush.msra.mxu0 %v115
    %263 = vmatpush.msra.mxu0 %v107
    %264 = vmatpush.msra.mxu0 %v99
    %265 = vmatpush.msra.mxu0 %v91
    %266 = vmatpush.msra.mxu0 %v83
    %267 = vmatpush.msra.mxu0 %v75
    %268 = vmatpush.msra.mxu0 %v67
    %269 = vmatmul.f32.gmra.mxu0 %v58
    %v270 = vpop.f32.mrf.mxu0
    %v271 = vadd.f32 %v197, %v270
    %272 = vmatmul.f32.gmra.mxu0 %v59
    %v273 = vpop.f32.mrf.mxu0
    %v274 = vadd.f32 %v197, %v273
    %275 = vmatmul.f32.gmra.mxu0 %v60
    %v276 = vpop.f32.mrf.mxu0
    %v277 = vadd.f32 %v197, %v276
    %278 = vmatmul.f32.gmra.mxu0 %v61
    %v279 = vpop.f32.mrf.mxu0
    %v280 = vadd.f32 %v197, %v279
    %281 = vmatmul.f32.gmra.mxu0 %v62
    %v282 = vpop.f32.mrf.mxu0
    %v283 = vadd.f32 %v197, %v282
    %284 = vmatmul.f32.gmra.mxu0 %v63
    %v285 = vpop.f32.mrf.mxu0
    %v286 = vadd.f32 %v197, %v285
    %287 = vmatmul.f32.gmra.mxu0 %v64
    %v288 = vpop.f32.mrf.mxu0
    %v289 = vadd.f32 %v197, %v288
    %290 = vmatmul.f32.gmra.mxu0 %v65
    %v291 = vpop.f32.mrf.mxu0
    %v292 = vadd.f32 %v197, %v291
    %293 = vdwg.mxu0
    %294 = vmatpush.msra.mxu0 %v188
    %295 = vmatpush.msra.mxu0 %v180
    %296 = vmatpush.msra.mxu0 %v172
    %297 = vmatpush.msra.mxu0 %v164
    %298 = vmatpush.msra.mxu0 %v156
    %299 = vmatpush.msra.mxu0 %v148
    %300 = vmatpush.msra.mxu0 %v140
    %301 = vmatpush.msra.mxu0 %v132
    %302 = vmatpush.msra.mxu0 %v124
    %303 = vmatpush.msra.mxu0 %v116
    %304 = vmatpush.msra.mxu0 %v108
    %305 = vmatpush.msra.mxu0 %v100
    %306 = vmatpush.msra.mxu0 %v92
    %307 = vmatpush.msra.mxu0 %v84
    %308 = vmatpush.msra.mxu0 %v76
    %309 = vmatpush.msra.mxu0 %v68
    %310 = vmatmul.f32.gmra.mxu0 %v58
    %v311 = vpop.f32.mrf.mxu0
    %v312 = vadd.f32 %v198, %v311
    %313 = vmatmul.f32.gmra.mxu0 %v59
    %v314 = vpop.f32.mrf.mxu0
    %v315 = vadd.f32 %v198, %v314
    %316 = vmatmul.f32.gmra.mxu0 %v60
    %v317 = vpop.f32.mrf.mxu0
    %v318 = vadd.f32 %v198, %v317
    %319 = vmatmul.f32.gmra.mxu0 %v61
    %v320 = vpop.f32.mrf.mxu0
    %v321 = vadd.f32 %v198, %v320
    %322 = vmatmul.f32.gmra.mxu0 %v62
    %v323 = vpop.f32.mrf.mxu0
    %v324 = vadd.f32 %v198, %v323
    %325 = vmatmul.f32.gmra.mxu0 %v63
    %v326 = vpop.f32.mrf.mxu0
    %v327 = vadd.f32 %v198, %v326
    %328 = vmatmul.f32.gmra.mxu0 %v64
    %v329 = vpop.f32.mrf.mxu0
    %v330 = vadd.f32 %v198, %v329
    %331 = vmatmul.f32.gmra.mxu0 %v65
    %v332 = vpop.f32.mrf.mxu0
    %v333 = vadd.f32 %v198, %v332
    %334 = vdwg.mxu0
    %335 = vmatpush.msra.mxu0 %v189
    %336 = vmatpush.msra.mxu0 %v181
    %337 = vmatpush.msra.mxu0 %v173
    %338 = vmatpush.msra.mxu0 %v165
    %339 = vmatpush.msra.mxu0 %v157
    %340 = vmatpush.msra.mxu0 %v149
    %341 = vmatpush.msra.mxu0 %v141
    %342 = vmatpush.msra.mxu0 %v133
    %343 = vmatpush.msra.mxu0 %v125
    %344 = vmatpush.msra.mxu0 %v117
    %345 = vmatpush.msra.mxu0 %v109
    %346 = vmatpush.msra.mxu0 %v101
    %347 = vmatpush.msra.mxu0 %v93
    %348 = vmatpush.msra.mxu0 %v85
    %349 = vmatpush.msra.mxu0 %v77
    %350 = vmatpush.msra.mxu0 %v69
    %351 = vmatmul.f32.gmra.mxu0 %v58
    %v352 = vpop.f32.mrf.mxu0
    %v353 = vadd.f32 %v199, %v352
    %354 = vmatmul.f32.gmra.mxu0 %v59
    %v355 = vpop.f32.mrf.mxu0
    %v356 = vadd.f32 %v199, %v355
    %357 = vmatmul.f32.gmra.mxu0 %v60
    %v358 = vpop.f32.mrf.mxu0
    %v359 = vadd.f32 %v199, %v358
    %360 = vmatmul.f32.gmra.mxu0 %v61
    %v361 = vpop.f32.mrf.mxu0
    %v362 = vadd.f32 %v199, %v361
    %363 = vmatmul.f32.gmra.mxu0 %v62
    %v364 = vpop.f32.mrf.mxu0
    %v365 = vadd.f32 %v199, %v364
    %366 = vmatmul.f32.gmra.mxu0 %v63
    %v367 = vpop.f32.mrf.mxu0
    %v368 = vadd.f32 %v199, %v367
    %369 = vmatmul.f32.gmra.mxu0 %v64
    %v370 = vpop.f32.mrf.mxu0
    %v371 = vadd.f32 %v199, %v370
    %372 = vmatmul.f32.gmra.mxu0 %v65
    %v373 = vpop.f32.mrf.mxu0
    %v374 = vadd.f32 %v199, %v373
    %375 = vdwg.mxu0
    %376 = vmatpush.msra.mxu0 %v190
    %377 = vmatpush.msra.mxu0 %v182
    %378 = vmatpush.msra.mxu0 %v174
    %379 = vmatpush.msra.mxu0 %v166
    %380 = vmatpush.msra.mxu0 %v158
    %381 = vmatpush.msra.mxu0 %v150
    %382 = vmatpush.msra.mxu0 %v142
    %383 = vmatpush.msra.mxu0 %v134
    %384 = vmatpush.msra.mxu0 %v126
    %385 = vmatpush.msra.mxu0 %v118
    %386 = vmatpush.msra.mxu0 %v110
    %387 = vmatpush.msra.mxu0 %v102
    %388 = vmatpush.msra.mxu0 %v94
    %389 = vmatpush.msra.mxu0 %v86
    %390 = vmatpush.msra.mxu0 %v78
    %391 = vmatpush.msra.mxu0 %v70
    %392 = vmatmul.f32.gmra.mxu0 %v58
    %v393 = vpop.f32.mrf.mxu0
    %v394 = vadd.f32 %v200, %v393
    %395 = vmatmul.f32.gmra.mxu0 %v59
    %v396 = vpop.f32.mrf.mxu0
    %v397 = vadd.f32 %v200, %v396
    %398 = vmatmul.f32.gmra.mxu0 %v60
    %v399 = vpop.f32.mrf.mxu0
    %v400 = vadd.f32 %v200, %v399
    %401 = vmatmul.f32.gmra.mxu0 %v61
    %v402 = vpop.f32.mrf.mxu0
    %v403 = vadd.f32 %v200, %v402
    %404 = vmatmul.f32.gmra.mxu0 %v62
    %v405 = vpop.f32.mrf.mxu0
    %v406 = vadd.f32 %v200, %v405
    %407 = vmatmul.f32.gmra.mxu0 %v63
    %v408 = vpop.f32.mrf.mxu0
    %v409 = vadd.f32 %v200, %v408
    %410 = vmatmul.f32.gmra.mxu0 %v64
    %v411 = vpop.f32.mrf.mxu0
    %v412 = vadd.f32 %v200, %v411
    %413 = vmatmul.f32.gmra.mxu0 %v65
    %v414 = vpop.f32.mrf.mxu0
    %v415 = vadd.f32 %v200, %v414
    %416 = vdwg.mxu0
    %417 = vmatpush.msra.mxu0 %v191
    %418 = vmatpush.msra.mxu0 %v183
    %419 = vmatpush.msra.mxu0 %v175
    %420 = vmatpush.msra.mxu0 %v167
    %421 = vmatpush.msra.mxu0 %v159
    %422 = vmatpush.msra.mxu0 %v151
    %423 = vmatpush.msra.mxu0 %v143
    %424 = vmatpush.msra.mxu0 %v135
    %425 = vmatpush.msra.mxu0 %v127
    %426 = vmatpush.msra.mxu0 %v119
    %427 = vmatpush.msra.mxu0 %v111
    %428 = vmatpush.msra.mxu0 %v103
    %429 = vmatpush.msra.mxu0 %v95
    %430 = vmatpush.msra.mxu0 %v87
    %431 = vmatpush.msra.mxu0 %v79
    %432 = vmatpush.msra.mxu0 %v71
    %433 = vmatmul.f32.gmra.mxu0 %v58
    %v434 = vpop.f32.mrf.mxu0
    %v435 = vadd.f32 %v201, %v434
    %436 = vmatmul.f32.gmra.mxu0 %v59
    %v437 = vpop.f32.mrf.mxu0
    %v438 = vadd.f32 %v201, %v437
    %439 = vmatmul.f32.gmra.mxu0 %v60
    %v440 = vpop.f32.mrf.mxu0
    %v441 = vadd.f32 %v201, %v440
    %442 = vmatmul.f32.gmra.mxu0 %v61
    %v443 = vpop.f32.mrf.mxu0
    %v444 = vadd.f32 %v201, %v443
    %445 = vmatmul.f32.gmra.mxu0 %v62
    %v446 = vpop.f32.mrf.mxu0
    %v447 = vadd.f32 %v201, %v446
    %448 = vmatmul.f32.gmra.mxu0 %v63
    %v449 = vpop.f32.mrf.mxu0
    %v450 = vadd.f32 %v201, %v449
    %451 = vmatmul.f32.gmra.mxu0 %v64
    %v452 = vpop.f32.mrf.mxu0
    %v453 = vadd.f32 %v201, %v452
    %454 = vmatmul.f32.gmra.mxu0 %v65
    %v455 = vpop.f32.mrf.mxu0
    %v456 = vadd.f32 %v201, %v455
    %457 = vdwg.mxu0
    %458 = vmatpush.msra.mxu0 %v192
    %459 = vmatpush.msra.mxu0 %v184
    %460 = vmatpush.msra.mxu0 %v176
    %461 = vmatpush.msra.mxu0 %v168
    %462 = vmatpush.msra.mxu0 %v160
    %463 = vmatpush.msra.mxu0 %v152
    %464 = vmatpush.msra.mxu0 %v144
    %465 = vmatpush.msra.mxu0 %v136
    %466 = vmatpush.msra.mxu0 %v128
    %467 = vmatpush.msra.mxu0 %v120
    %468 = vmatpush.msra.mxu0 %v112
    %469 = vmatpush.msra.mxu0 %v104
    %470 = vmatpush.msra.mxu0 %v96
    %471 = vmatpush.msra.mxu0 %v88
    %472 = vmatpush.msra.mxu0 %v80
    %473 = vmatpush.msra.mxu0 %v72
    %474 = vmatmul.f32.gmra.mxu0 %v58
    %v475 = vpop.f32.mrf.mxu0
    %v476 = vadd.f32 %v202, %v475
    %477 = vmatmul.f32.gmra.mxu0 %v59
    %v478 = vpop.f32.mrf.mxu0
    %v479 = vadd.f32 %v202, %v478
    %480 = vmatmul.f32.gmra.mxu0 %v60
    %v481 = vpop.f32.mrf.mxu0
    %v482 = vadd.f32 %v202, %v481
    %483 = vmatmul.f32.gmra.mxu0 %v61
    %v484 = vpop.f32.mrf.mxu0
    %v485 = vadd.f32 %v202, %v484
    %486 = vmatmul.f32.gmra.mxu0 %v62
    %v487 = vpop.f32.mrf.mxu0
    %v488 = vadd.f32 %v202, %v487
    %489 = vmatmul.f32.gmra.mxu0 %v63
    %v490 = vpop.f32.mrf.mxu0
    %v491 = vadd.f32 %v202, %v490
    %492 = vmatmul.f32.gmra.mxu0 %v64
    %v493 = vpop.f32.mrf.mxu0
    %v494 = vadd.f32 %v202, %v493
    %495 = vmatmul.f32.gmra.mxu0 %v65
    %v496 = vpop.f32.mrf.mxu0
    %v497 = vadd.f32 %v202, %v496
    %498 = vdwg.mxu0
    %499 = vmatpush.msra.mxu0 %v193
    %500 = vmatpush.msra.mxu0 %v185
    %501 = vmatpush.msra.mxu0 %v177
    %502 = vmatpush.msra.mxu0 %v169
    %503 = vmatpush.msra.mxu0 %v161
    %504 = vmatpush.msra.mxu0 %v153
    %505 = vmatpush.msra.mxu0 %v145
    %506 = vmatpush.msra.mxu0 %v137
    %507 = vmatpush.msra.mxu0 %v129
    %508 = vmatpush.msra.mxu0 %v121
    %509 = vmatpush.msra.mxu0 %v113
    %510 = vmatpush.msra.mxu0 %v105
    %511 = vmatpush.msra.mxu0 %v97
    %512 = vmatpush.msra.mxu0 %v89
    %513 = vmatpush.msra.mxu0 %v81
    %514 = vmatpush.msra.mxu0 %v73
    %515 = vmatmul.f32.gmra.mxu0 %v58
    %v516 = vpop.f32.mrf.mxu0
    %v517 = vadd.f32 %v203, %v516
    %518 = vmatmul.f32.gmra.mxu0 %v59
    %v519 = vpop.f32.mrf.mxu0
    %v520 = vadd.f32 %v203, %v519
    %521 = vmatmul.f32.gmra.mxu0 %v60
    %v522 = vpop.f32.mrf.mxu0
    %v523 = vadd.f32 %v203, %v522
    %524 = vmatmul.f32.gmra.mxu0 %v61
    %v525 = vpop.f32.mrf.mxu0
    %v526 = vadd.f32 %v203, %v525
    %527 = vmatmul.f32.gmra.mxu0 %v62
    %v528 = vpop.f32.mrf.mxu0
    %v529 = vadd.f32 %v203, %v528
    %530 = vmatmul.f32.gmra.mxu0 %v63
    %v531 = vpop.f32.mrf.mxu0
    %v532 = vadd.f32 %v203, %v531
    %533 = vmatmul.f32.gmra.mxu0 %v64
    %v534 = vpop.f32.mrf.mxu0
    %v535 = vadd.f32 %v203, %v534
    %536 = vmatmul.f32.gmra.mxu0 %v65
    %v537 = vpop.f32.mrf.mxu0
    %v538 = vadd.f32 %v203, %v537
    %539 = vdwg.mxu0
    %540 = vst [vmem:[#allocation2] sm:$0xff] %v230
    %541 = vst [vmem:[#allocation2 + $0x8] sm:$0xff] %v271
    %542 = vst [vmem:[#allocation2 + $0x10] sm:$0xff] %v312
    %543 = vst [vmem:[#allocation2 + $0x18] sm:$0xff] %v353
    %544 = vst [vmem:[#allocation2 + $0x20] sm:$0xff] %v394
    %545 = vst [vmem:[#allocation2 + $0x28] sm:$0xff] %v435
    %546 = vst [vmem:[#allocation2 + $0x30] sm:$0xff] %v476
    %547 = vst [vmem:[#allocation2 + $0x38] sm:$0xff] %v517
    %548 = vst [vmem:[#allocation2 + $0x40] sm:$0xff] %v233
    %549 = vst [vmem:[#allocation2 + $0x48] sm:$0xff] %v274
    %550 = vst [vmem:[#allocation2 + $0x50] sm:$0xff] %v315
    %551 = vst [vmem:[#allocation2 + $0x58] sm:$0xff] %v356
    %552 = vst [vmem:[#allocation2 + $0x60] sm:$0xff] %v397
    %553 = vst [vmem:[#allocation2 + $0x68] sm:$0xff] %v438
    %554 = vst [vmem:[#allocation2 + $0x70] sm:$0xff] %v479
    %555 = vst [vmem:[#allocation2 + $0x78] sm:$0xff] %v520
    %556 = vst [vmem:[#allocation2 + $0x80] sm:$0xff] %v236
    %557 = vst [vmem:[#allocation2 + $0x88] sm:$0xff] %v277
    %558 = vst [vmem:[#allocation2 + $0x90] sm:$0xff] %v318
    %559 = vst [vmem:[#allocation2 + $0x98] sm:$0xff] %v359
    %560 = vst [vmem:[#allocation2 + $0xa0] sm:$0xff] %v400
    %561 = vst [vmem:[#allocation2 + $0xa8] sm:$0xff] %v441
    %562 = vst [vmem:[#allocation2 + $0xb0] sm:$0xff] %v482
    %563 = vst [vmem:[#allocation2 + $0xb8] sm:$0xff] %v523
    %564 = vst [vmem:[#allocation2 + $0xc0] sm:$0xff] %v239
    %565 = vst [vmem:[#allocation2 + $0xc8] sm:$0xff] %v280
    %566 = vst [vmem:[#allocation2 + $0xd0] sm:$0xff] %v321
    %567 = vst [vmem:[#allocation2 + $0xd8] sm:$0xff] %v362
    %568 = vst [vmem:[#allocation2 + $0xe0] sm:$0xff] %v403
    %569 = vst [vmem:[#allocation2 + $0xe8] sm:$0xff] %v444
    %570 = vst [vmem:[#allocation2 + $0xf0] sm:$0xff] %v485
    %571 = vst [vmem:[#allocation2 + $0xf8] sm:$0xff] %v526
    %572 = vst [vmem:[#allocation2 + $0x100] sm:$0xff] %v242
    %573 = vst [vmem:[#allocation2 + $0x108] sm:$0xff] %v283
    %574 = vst [vmem:[#allocation2 + $0x110] sm:$0xff] %v324
    %575 = vst [vmem:[#allocation2 + $0x118] sm:$0xff] %v365
    %576 = vst [vmem:[#allocation2 + $0x120] sm:$0xff] %v406
    %577 = vst [vmem:[#allocation2 + $0x128] sm:$0xff] %v447
    %578 = vst [vmem:[#allocation2 + $0x130] sm:$0xff] %v488
    %579 = vst [vmem:[#allocation2 + $0x138] sm:$0xff] %v529
    %580 = vst [vmem:[#allocation2 + $0x140] sm:$0xff] %v245
    %581 = vst [vmem:[#allocation2 + $0x148] sm:$0xff] %v286
    %582 = vst [vmem:[#allocation2 + $0x150] sm:$0xff] %v327
    %583 = vst [vmem:[#allocation2 + $0x158] sm:$0xff] %v368
    %584 = vst [vmem:[#allocation2 + $0x160] sm:$0xff] %v409
    %585 = vst [vmem:[#allocation2 + $0x168] sm:$0xff] %v450
    %586 = vst [vmem:[#allocation2 + $0x170] sm:$0xff] %v491
    %587 = vst [vmem:[#allocation2 + $0x178] sm:$0xff] %v532
    %588 = vst [vmem:[#allocation2 + $0x180] sm:$0xff] %v248
    %589 = vst [vmem:[#allocation2 + $0x188] sm:$0xff] %v289
    %590 = vst [vmem:[#allocation2 + $0x190] sm:$0xff] %v330
    %591 = vst [vmem:[#allocation2 + $0x198] sm:$0xff] %v371
    %592 = vst [vmem:[#allocation2 + $0x1a0] sm:$0xff] %v412
    %593 = vst [vmem:[#allocation2 + $0x1a8] sm:$0xff] %v453
    %594 = vst [vmem:[#allocation2 + $0x1b0] sm:$0xff] %v494
    %595 = vst [vmem:[#allocation2 + $0x1b8] sm:$0xff] %v535
    %596 = vst [vmem:[#allocation2 + $0x1c0] sm:$0xff] %v251
    %597 = vst [vmem:[#allocation2 + $0x1c8] sm:$0xff] %v292
    %598 = vst [vmem:[#allocation2 + $0x1d0] sm:$0xff] %v333
    %599 = vst [vmem:[#allocation2 + $0x1d8] sm:$0xff] %v374
    %600 = vst [vmem:[#allocation2 + $0x1e0] sm:$0xff] %v415
    %601 = vst [vmem:[#allocation2 + $0x1e8] sm:$0xff] %v456
    %602 = vst [vmem:[#allocation2 + $0x1f0] sm:$0xff] %v497
    %603 = vst [vmem:[#allocation2 + $0x1f8] sm:$0xff] %v538
    %v604 = vld [vmem:[#allocation5] sm:$0xff]
    %v605 = vld [vmem:[#allocation5 + $0x8] sm:$0xff]
    %v606 = vld [vmem:[#allocation5 + $0x10] sm:$0xff]
    %v607 = vld [vmem:[#allocation5 + $0x18] sm:$0xff]
    %v608 = vld [vmem:[#allocation5 + $0x20] sm:$0xff]
    %v609 = vld [vmem:[#allocation5 + $0x28] sm:$0xff]
    %v610 = vld [vmem:[#allocation5 + $0x30] sm:$0xff]
    %v611 = vld [vmem:[#allocation5 + $0x38] sm:$0xff]
    %v612 = vld [vmem:[#allocation5 + $0x40] sm:$0xff]
    %v613 = vld [vmem:[#allocation5 + $0x48] sm:$0xff]
    %v614 = vld [vmem:[#allocation5 + $0x50] sm:$0xff]
    %v615 = vld [vmem:[#allocation5 + $0x58] sm:$0xff]
    %v616 = vld [vmem:[#allocation5 + $0x60] sm:$0xff]
    %v617 = vld [vmem:[#allocation5 + $0x68] sm:$0xff]
    %v618 = vld [vmem:[#allocation5 + $0x70] sm:$0xff]
    %v619 = vld [vmem:[#allocation5 + $0x78] sm:$0xff]
    %v620 = vld [vmem:[#allocation5 + $0x80] sm:$0xff]
    %v621 = vld [vmem:[#allocation5 + $0x88] sm:$0xff]
    %v622 = vld [vmem:[#allocation5 + $0x90] sm:$0xff]
    %v623 = vld [vmem:[#allocation5 + $0x98] sm:$0xff]
    %v624 = vld [vmem:[#allocation5 + $0xa0] sm:$0xff]
    %v625 = vld [vmem:[#allocation5 + $0xa8] sm:$0xff]
    %v626 = vld [vmem:[#allocation5 + $0xb0] sm:$0xff]
    %v627 = vld [vmem:[#allocation5 + $0xb8] sm:$0xff]
    %v628 = vld [vmem:[#allocation5 + $0xc0] sm:$0xff]
    %v629 = vld [vmem:[#allocation5 + $0xc8] sm:$0xff]
    %v630 = vld [vmem:[#allocation5 + $0xd0] sm:$0xff]
    %v631 = vld [vmem:[#allocation5 + $0xd8] sm:$0xff]
    %v632 = vld [vmem:[#allocation5 + $0xe0] sm:$0xff]
    %v633 = vld [vmem:[#allocation5 + $0xe8] sm:$0xff]
    %v634 = vld [vmem:[#allocation5 + $0xf0] sm:$0xff]
    %v635 = vld [vmem:[#allocation5 + $0xf8] sm:$0xff]
    %v636 = vld [vmem:[#allocation5 + $0x100] sm:$0xff]
    %v637 = vld [vmem:[#allocation5 + $0x108] sm:$0xff]
    %v638 = vld [vmem:[#allocation5 + $0x110] sm:$0xff]
    %v639 = vld [vmem:[#allocation5 + $0x118] sm:$0xff]
    %v640 = vld [vmem:[#allocation5 + $0x120] sm:$0xff]
    %v641 = vld [vmem:[#allocation5 + $0x128] sm:$0xff]
    %v642 = vld [vmem:[#allocation5 + $0x130] sm:$0xff]
    %v643 = vld [vmem:[#allocation5 + $0x138] sm:$0xff]
    %v644 = vld [vmem:[#allocation5 + $0x140] sm:$0xff]
    %v645 = vld [vmem:[#allocation5 + $0x148] sm:$0xff]
    %v646 = vld [vmem:[#allocation5 + $0x150] sm:$0xff]
    %v647 = vld [vmem:[#allocation5 + $0x158] sm:$0xff]
    %v648 = vld [vmem:[#allocation5 + $0x160] sm:$0xff]
    %v649 = vld [vmem:[#allocation5 + $0x168] sm:$0xff]
    %v650 = vld [vmem:[#allocation5 + $0x170] sm:$0xff]
    %v651 = vld [vmem:[#allocation5 + $0x178] sm:$0xff]
    %v652 = vld [vmem:[#allocation5 + $0x180] sm:$0xff]
    %v653 = vld [vmem:[#allocation5 + $0x188] sm:$0xff]
    %v654 = vld [vmem:[#allocation5 + $0x190] sm:$0xff]
    %v655 = vld [vmem:[#allocation5 + $0x198] sm:$0xff]
    %v656 = vld [vmem:[#allocation5 + $0x1a0] sm:$0xff]
    %v657 = vld [vmem:[#allocation5 + $0x1a8] sm:$0xff]
    %v658 = vld [vmem:[#allocation5 + $0x1b0] sm:$0xff]
    %v659 = vld [vmem:[#allocation5 + $0x1b8] sm:$0xff]
    %v660 = vld [vmem:[#allocation5 + $0x1c0] sm:$0xff]
    %v661 = vld [vmem:[#allocation5 + $0x1c8] sm:$0xff]
    %v662 = vld [vmem:[#allocation5 + $0x1d0] sm:$0xff]
    %v663 = vld [vmem:[#allocation5 + $0x1d8] sm:$0xff]
    %v664 = vld [vmem:[#allocation5 + $0x1e0] sm:$0xff]
    %v665 = vld [vmem:[#allocation5 + $0x1e8] sm:$0xff]
    %v666 = vld [vmem:[#allocation5 + $0x1f0] sm:$0xff]
    %v667 = vld [vmem:[#allocation5 + $0x1f8] sm:$0xff]
    %v668 = vld [vmem:[#allocation2] sm:$0xff]
    %v669 = vld [vmem:[#allocation2 + $0x8] sm:$0xff]
    %v670 = vld [vmem:[#allocation2 + $0x10] sm:$0xff]
    %v671 = vld [vmem:[#allocation2 + $0x18] sm:$0xff]
    %672 = vmatpush.msra.mxu0 %v664
    %673 = vmatpush.msra.mxu0 %v660
    %674 = vmatpush.msra.mxu0 %v656
    %675 = vmatpush.msra.mxu0 %v652
    %676 = vmatpush.msra.mxu0 %v648
    %677 = vmatpush.msra.mxu0 %v644
    %678 = vmatpush.msra.mxu0 %v640
    %679 = vmatpush.msra.mxu0 %v636
    %680 = vmatpush.msra.mxu0 %v632
    %681 = vmatpush.msra.mxu0 %v628
    %682 = vmatpush.msra.mxu0 %v624
    %683 = vmatpush.msra.mxu0 %v620
    %684 = vmatpush.msra.mxu0 %v616
    %685 = vmatpush.msra.mxu0 %v612
    %686 = vmatpush.msra.mxu0 %v608
    %687 = vmatpush.msra.mxu0 %v604
    %688 = vmatmul.f32.gmra.mxu0 0.0
    %v689 = vpop.f32.mrf.mxu0
    %v690 = vadd.f32 0.0, %v689
    %691 = vdwg.mxu0
    %692 = vmatpush.msra.mxu0 %v665
    %693 = vmatpush.msra.mxu0 %v661
    %694 = vmatpush.msra.mxu0 %v657
    %695 = vmatpush.msra.mxu0 %v653
    %696 = vmatpush.msra.mxu0 %v649
    %697 = vmatpush.msra.mxu0 %v645
    %698 = vmatpush.msra.mxu0 %v641
    %699 = vmatpush.msra.mxu0 %v637
    %700 = vmatpush.msra.mxu0 %v633
    %701 = vmatpush.msra.mxu0 %v629
    %702 = vmatpush.msra.mxu0 %v625
    %703 = vmatpush.msra.mxu0 %v621
    %704 = vmatpush.msra.mxu0 %v617
    %705 = vmatpush.msra.mxu0 %v613
    %706 = vmatpush.msra.mxu0 %v609
    %707 = vmatpush.msra.mxu0 %v605
    %708 = vmatmul.f32.gmra.mxu0 0.0
    %v709 = vpop.f32.mrf.mxu0
    %v710 = vadd.f32 0.0, %v709
    %711 = vdwg.mxu0
    %712 = vmatpush.msra.mxu0 %v666
    %713 = vmatpush.msra.mxu0 %v662
    %714 = vmatpush.msra.mxu0 %v658
    %715 = vmatpush.msra.mxu0 %v654
    %716 = vmatpush.msra.mxu0 %v650
    %717 = vmatpush.msra.mxu0 %v646
    %718 = vmatpush.msra.mxu0 %v642
    %719 = vmatpush.msra.mxu0 %v638
    %720 = vmatpush.msra.mxu0 %v634
    %721 = vmatpush.msra.mxu0 %v630
    %722 = vmatpush.msra.mxu0 %v626
    %723 = vmatpush.msra.mxu0 %v622
    %724 = vmatpush.msra.mxu0 %v618
    %725 = vmatpush.msra.mxu0 %v614
    %726 = vmatpush.msra.mxu0 %v610
    %727 = vmatpush.msra.mxu0 %v606
    %728 = vmatmul.f32.gmra.mxu0 0.0
    %v729 = vpop.f32.mrf.mxu0
    %v730 = vadd.f32 0.0, %v729
    %731 = vdwg.mxu0
    %732 = vmatpush.msra.mxu0 %v667
    %733 = vmatpush.msra.mxu0 %v663
    %734 = vmatpush.msra.mxu0 %v659
    %735 = vmatpush.msra.mxu0 %v655
    %736 = vmatpush.msra.mxu0 %v651
    %737 = vmatpush.msra.mxu0 %v647
    %738 = vmatpush.msra.mxu0 %v643
    %739 = vmatpush.msra.mxu0 %v639
    %740 = vmatpush.msra.mxu0 %v635
    %741 = vmatpush.msra.mxu0 %v631
    %742 = vmatpush.msra.mxu0 %v627
    %743 = vmatpush.msra.mxu0 %v623
    %744 = vmatpush.msra.mxu0 %v619
    %745 = vmatpush.msra.mxu0 %v615
    %746 = vmatpush.msra.mxu0 %v611
    %747 = vmatpush.msra.mxu0 %v607
    %748 = vmatmul.f32.gmra.mxu0 0.0
    %v749 = vpop.f32.mrf.mxu0
    %v750 = vadd.f32 0.0, %v749
    %751 = vdwg.mxu0
    %v752 = vadd.f32 %v668, %v690
    %v753 = vadd.f32 %v669, %v710
    %v754 = vadd.f32 %v670, %v730
    %v755 = vadd.f32 %v671, %v750
    %v756 = vxor.u32 %v752, 2147483648
    %v757 = vxor.u32 %v753, 2147483648
    %v758 = vxor.u32 %v754, 2147483648
    %v759 = vmul.f32 %v756, 1.442695
    %v760 = vpow.pop %v759
    %v761 = vmul.f32 %v757, 1.442695
    %v762 = vpow.pop %v761
    %v763 = vmul.f32 %v758, 1.442695
    %v764 = vpow.pop %v763
    %v765 = vadd.f32 %v760, 1.0
    %v766 = vadd.f32 %v762, 1.0
    %v767 = vadd.f32 %v764, 1.0
    %v768 = vrcp.pop %v765
    %v769 = vmul.f32 %v765, %v768
    %v770 = vsub.f32 1.0, %v769
    %v771 = vmul.f32 %v768, %v770
    %v772 = vadd.f32 %v768, %v771
    %vm773 = vweird.f32 %v765
    %vm774 = vweird.f32 %v768
    %vm775 = vmor %vm773, %vm774
    %v776 = vsel %vm775, %v768, %v772
    %v777 = vand.u32 2147483647, %v765
    %vm778 = vcmp.eq.f32.partialorder %v777, 8.507059e+37
    %v779 = vand.u32 %v765, 2147483648
    %v780 = vor.u32 1.1754944e-38, %v779
    %v781 = vsel %vm778, %v780, %v776
    %v782 = vmul.f32 1.0, %v781
    %v783 = vrcp.pop %v766
    %v784 = vmul.f32 %v766, %v783
    %v785 = vsub.f32 1.0, %v784
    %v786 = vmul.f32 %v783, %v785
    %v787 = vadd.f32 %v783, %v786
    %vm788 = vweird.f32 %v766
    %vm789 = vweird.f32 %v783
    %vm790 = vmor %vm788, %vm789
    %v791 = vsel %vm790, %v783, %v787
    %v792 = vand.u32 2147483647, %v766
    %vm793 = vcmp.eq.f32.partialorder %v792, 8.507059e+37
    %v794 = vand.u32 %v766, 2147483648
    %v795 = vor.u32 1.1754944e-38, %v794
    %v796 = vsel %vm793, %v795, %v791
    %v797 = vmul.f32 1.0, %v796
    %v798 = vrcp.pop %v767
    %v799 = vmul.f32 %v767, %v798
    %v800 = vsub.f32 1.0, %v799
    %v801 = vmul.f32 %v798, %v800
    %v802 = vadd.f32 %v798, %v801
    %vm803 = vweird.f32 %v767
    %vm804 = vweird.f32 %v798
    %vm805 = vmor %vm803, %vm804
    %v806 = vsel %vm805, %v798, %v802
    %v807 = vand.u32 2147483647, %v767
    %vm808 = vcmp.eq.f32.partialorder %v807, 8.507059e+37
    %v809 = vand.u32 %v767, 2147483648
    %v810 = vor.u32 1.1754944e-38, %v809
    %v811 = vsel %vm808, %v810, %v806
    %v812 = vmul.f32 1.0, %v811
    %v813 = vtanh.pop %v755
    %v814 = vmul.f32 %v797, 0.0
    %v815 = vmul.f32 %v782, %v813
    %v816 = vadd.f32 %v814, %v815
    %v817 = vtanh.pop %v816
    %v818 = vmul.f32 %v812, %v817
    %v819 = vld [vmem:[#allocation2 + $0x40] sm:$0xff]
    %v820 = vld [vmem:[#allocation2 + $0x48] sm:$0xff]
    %v821 = vld [vmem:[#allocation2 + $0x50] sm:$0xff]
    %v822 = vld [vmem:[#allocation2 + $0x58] sm:$0xff]
    %823 = vmatpush.msra.mxu0 %v664
    %824 = vmatpush.msra.mxu0 %v660
    %825 = vmatpush.msra.mxu0 %v656
    %826 = vmatpush.msra.mxu0 %v652
    %827 = vmatpush.msra.mxu0 %v648
    %828 = vmatpush.msra.mxu0 %v644
    %829 = vmatpush.msra.mxu0 %v640
    %830 = vmatpush.msra.mxu0 %v636
    %831 = vmatpush.msra.mxu0 %v632
    %832 = vmatpush.msra.mxu0 %v628
    %833 = vmatpush.msra.mxu0 %v624
    %834 = vmatpush.msra.mxu0 %v620
    %835 = vmatpush.msra.mxu0 %v616
    %836 = vmatpush.msra.mxu0 %v612
    %837 = vmatpush.msra.mxu0 %v608
    %838 = vmatpush.msra.mxu0 %v604
    %839 = vmatmul.f32.gmra.mxu0 %v818
    %v840 = vpop.f32.mrf.mxu0
    %v841 = vadd.f32 0.0, %v840
    %842 = vdwg.mxu0
    %843 = vmatpush.msra.mxu0 %v665
    %844 = vmatpush.msra.mxu0 %v661
    %845 = vmatpush.msra.mxu0 %v657
    %846 = vmatpush.msra.mxu0 %v653
    %847 = vmatpush.msra.mxu0 %v649
    %848 = vmatpush.msra.mxu0 %v645
    %849 = vmatpush.msra.mxu0 %v641
    %850 = vmatpush.msra.mxu0 %v637
    %851 = vmatpush.msra.mxu0 %v633
    %852 = vmatpush.msra.mxu0 %v629
    %853 = vmatpush.msra.mxu0 %v625
    %854 = vmatpush.msra.mxu0 %v621
    %855 = vmatpush.msra.mxu0 %v617
    %856 = vmatpush.msra.mxu0 %v613
    %857 = vmatpush.msra.mxu0 %v609
    %858 = vmatpush.msra.mxu0 %v605
    %859 = vmatmul.f32.gmra.mxu0 %v818
    %v860 = vpop.f32.mrf.mxu0
    %v861 = vadd.f32 0.0, %v860
    %862 = vdwg.mxu0
    %863 = vmatpush.msra.mxu0 %v666
    %864 = vmatpush.msra.mxu0 %v662
    %865 = vmatpush.msra.mxu0 %v658
    %866 = vmatpush.msra.mxu0 %v654
    %867 = vmatpush.msra.mxu0 %v650
    %868 = vmatpush.msra.mxu0 %v646
    %869 = vmatpush.msra.mxu0 %v642
    %870 = vmatpush.msra.mxu0 %v638
    %871 = vmatpush.msra.mxu0 %v634
    %872 = vmatpush.msra.mxu0 %v630
    %873 = vmatpush.msra.mxu0 %v626
    %874 = vmatpush.msra.mxu0 %v622
    %875 = vmatpush.msra.mxu0 %v618
    %876 = vmatpush.msra.mxu0 %v614
    %877 = vmatpush.msra.mxu0 %v610
    %878 = vmatpush.msra.mxu0 %v606
    %879 = vmatmul.f32.gmra.mxu0 %v818
    %v880 = vpop.f32.mrf.mxu0
    %v881 = vadd.f32 0.0, %v880
    %882 = vdwg.mxu0
    %883 = vmatpush.msra.mxu0 %v667
    %884 = vmatpush.msra.mxu0 %v663
    %885 = vmatpush.msra.mxu0 %v659
    %886 = vmatpush.msra.mxu0 %v655
    %887 = vmatpush.msra.mxu0 %v651
    %888 = vmatpush.msra.mxu0 %v647
    %889 = vmatpush.msra.mxu0 %v643
    %890 = vmatpush.msra.mxu0 %v639
    %891 = vmatpush.msra.mxu0 %v635
    %892 = vmatpush.msra.mxu0 %v631
    %893 = vmatpush.msra.mxu0 %v627
    %894 = vmatpush.msra.mxu0 %v623
    %895 = vmatpush.msra.mxu0 %v619
    %896 = vmatpush.msra.mxu0 %v615
    %897 = vmatpush.msra.mxu0 %v611
    %898 = vmatpush.msra.mxu0 %v607
    %899 = vmatmul.f32.gmra.mxu0 %v818
    %v900 = vpop.f32.mrf.mxu0
    %v901 = vadd.f32 0.0, %v900
    %902 = vdwg.mxu0
    %v903 = vadd.f32 %v819, %v841
    %v904 = vadd.f32 %v820, %v861
    %v905 = vadd.f32 %v821, %v881
    %v906 = vadd.f32 %v822, %v901
    %v907 = vxor.u32 %v903, 2147483648
    %v908 = vxor.u32 %v904, 2147483648
    %v909 = vxor.u32 %v905, 2147483648
    %v910 = vmul.f32 %v907, 1.442695
    %v911 = vpow.pop %v910
    %v912 = vmul.f32 %v908, 1.442695
    %v913 = vpow.pop %v912
    %v914 = vmul.f32 %v909, 1.442695
    %v915 = vpow.pop %v914
    %v916 = vadd.f32 %v911, 1.0
    %v917 = vadd.f32 %v913, 1.0
    %v918 = vadd.f32 %v915, 1.0
    %v919 = vrcp.pop %v916
    %v920 = vmul.f32 %v916, %v919
    %v921 = vsub.f32 1.0, %v920
    %v922 = vmul.f32 %v919, %v921
    %v923 = vadd.f32 %v919, %v922
    %vm924 = vweird.f32 %v916
    %vm925 = vweird.f32 %v919
    %vm926 = vmor %vm924, %vm925
    %v927 = vsel %vm926, %v919, %v923
    %v928 = vand.u32 2147483647, %v916
    %vm929 = vcmp.eq.f32.partialorder %v928, 8.507059e+37
    %v930 = vand.u32 %v916, 2147483648
    %v931 = vor.u32 1.1754944e-38, %v930
    %v932 = vsel %vm929, %v931, %v927
    %v933 = vmul.f32 1.0, %v932
    %v934 = vrcp.pop %v917
    %v935 = vmul.f32 %v917, %v934
    %v936 = vsub.f32 1.0, %v935
    %v937 = vmul.f32 %v934, %v936
    %v938 = vadd.f32 %v934, %v937
    %vm939 = vweird.f32 %v917
    %vm940 = vweird.f32 %v934
    %vm941 = vmor %vm939, %vm940
    %v942 = vsel %vm941, %v934, %v938
    %v943 = vand.u32 2147483647, %v917
    %vm944 = vcmp.eq.f32.partialorder %v943, 8.507059e+37
    %v945 = vand.u32 %v917, 2147483648
    %v946 = vor.u32 1.1754944e-38, %v945
    %v947 = vsel %vm944, %v946, %v942
    %v948 = vmul.f32 1.0, %v947
    %v949 = vrcp.pop %v918
    %v950 = vmul.f32 %v918, %v949
    %v951 = vsub.f32 1.0, %v950
    %v952 = vmul.f32 %v949, %v951
    %v953 = vadd.f32 %v949, %v952
    %vm954 = vweird.f32 %v918
    %vm955 = vweird.f32 %v949
    %vm956 = vmor %vm954, %vm955
    %v957 = vsel %vm956, %v949, %v953
    %v958 = vand.u32 2147483647, %v918
    %vm959 = vcmp.eq.f32.partialorder %v958, 8.507059e+37
    %v960 = vand.u32 %v918, 2147483648
    %v961 = vor.u32 1.1754944e-38, %v960
    %v962 = vsel %vm959, %v961, %v957
    %v963 = vmul.f32 1.0, %v962
    %v964 = vtanh.pop %v906
    %v965 = vmul.f32 %v948, %v816
    %v966 = vmul.f32 %v933, %v964
    %v967 = vadd.f32 %v965, %v966
    %v968 = vtanh.pop %v967
    %v969 = vmul.f32 %v963, %v968
    %v970 = vld [vmem:[#allocation2 + $0x80] sm:$0xff]
    %v971 = vld [vmem:[#allocation2 + $0x88] sm:$0xff]
    %v972 = vld [vmem:[#allocation2 + $0x90] sm:$0xff]
    %v973 = vld [vmem:[#allocation2 + $0x98] sm:$0xff]
    %974 = vmatpush.msra.mxu0 %v664
    %975 = vmatpush.msra.mxu0 %v660
    %976 = vmatpush.msra.mxu0 %v656
    %977 = vmatpush.msra.mxu0 %v652
    %978 = vmatpush.msra.mxu0 %v648
    %979 = vmatpush.msra.mxu0 %v644
    %980 = vmatpush.msra.mxu0 %v640
    %981 = vmatpush.msra.mxu0 %v636
    %982 = vmatpush.msra.mxu0 %v632
    %983 = vmatpush.msra.mxu0 %v628
    %984 = vmatpush.msra.mxu0 %v624
    %985 = vmatpush.msra.mxu0 %v620
    %986 = vmatpush.msra.mxu0 %v616
    %987 = vmatpush.msra.mxu0 %v612
    %988 = vmatpush.msra.mxu0 %v608
    %989 = vmatpush.msra.mxu0 %v604
    %990 = vmatmul.f32.gmra.mxu0 %v969
    %v991 = vpop.f32.mrf.mxu0
    %v992 = vadd.f32 0.0, %v991
    %993 = vdwg.mxu0
    %994 = vmatpush.msra.mxu0 %v665
    %995 = vmatpush.msra.mxu0 %v661
    %996 = vmatpush.msra.mxu0 %v657
    %997 = vmatpush.msra.mxu0 %v653
    %998 = vmatpush.msra.mxu0 %v649
    %999 = vmatpush.msra.mxu0 %v645
    %1000 = vmatpush.msra.mxu0 %v641
    %1001 = vmatpush.msra.mxu0 %v637
    %1002 = vmatpush.msra.mxu0 %v633
    %1003 = vmatpush.msra.mxu0 %v629
    %1004 = vmatpush.msra.mxu0 %v625
    %1005 = vmatpush.msra.mxu0 %v621
    %1006 = vmatpush.msra.mxu0 %v617
    %1007 = vmatpush.msra.mxu0 %v613
    %1008 = vmatpush.msra.mxu0 %v609
    %1009 = vmatpush.msra.mxu0 %v605
    %1010 = vmatmul.f32.gmra.mxu0 %v969
    %v1011 = vpop.f32.mrf.mxu0
    %v1012 = vadd.f32 0.0, %v1011
    %1013 = vdwg.mxu0
    %1014 = vmatpush.msra.mxu0 %v666
    %1015 = vmatpush.msra.mxu0 %v662
    %1016 = vmatpush.msra.mxu0 %v658
    %1017 = vmatpush.msra.mxu0 %v654
    %1018 = vmatpush.msra.mxu0 %v650
    %1019 = vmatpush.msra.mxu0 %v646
    %1020 = vmatpush.msra.mxu0 %v642
    %1021 = vmatpush.msra.mxu0 %v638
    %1022 = vmatpush.msra.mxu0 %v634
    %1023 = vmatpush.msra.mxu0 %v630
    %1024 = vmatpush.msra.mxu0 %v626
    %1025 = vmatpush.msra.mxu0 %v622
    %1026 = vmatpush.msra.mxu0 %v618
    %1027 = vmatpush.msra.mxu0 %v614
    %1028 = vmatpush.msra.mxu0 %v610
    %1029 = vmatpush.msra.mxu0 %v606
    %1030 = vmatmul.f32.gmra.mxu0 %v969
    %v1031 = vpop.f32.mrf.mxu0
    %v1032 = vadd.f32 0.0, %v1031
    %1033 = vdwg.mxu0
    %1034 = vmatpush.msra.mxu0 %v667
    %1035 = vmatpush.msra.mxu0 %v663
    %1036 = vmatpush.msra.mxu0 %v659
    %1037 = vmatpush.msra.mxu0 %v655
    %1038 = vmatpush.msra.mxu0 %v651
    %1039 = vmatpush.msra.mxu0 %v647
    %1040 = vmatpush.msra.mxu0 %v643
    %1041 = vmatpush.msra.mxu0 %v639
    %1042 = vmatpush.msra.mxu0 %v635
    %1043 = vmatpush.msra.mxu0 %v631
    %1044 = vmatpush.msra.mxu0 %v627
    %1045 = vmatpush.msra.mxu0 %v623
    %1046 = vmatpush.msra.mxu0 %v619
    %1047 = vmatpush.msra.mxu0 %v615
    %1048 = vmatpush.msra.mxu0 %v611
    %1049 = vmatpush.msra.mxu0 %v607
    %1050 = vmatmul.f32.gmra.mxu0 %v969
    %v1051 = vpop.f32.mrf.mxu0
    %v1052 = vadd.f32 0.0, %v1051
    %1053 = vdwg.mxu0
    %v1054 = vadd.f32 %v970, %v992
    %v1055 = vadd.f32 %v971, %v1012
    %v1056 = vadd.f32 %v972, %v1032
    %v1057 = vadd.f32 %v973, %v1052
    %v1058 = vxor.u32 %v1054, 2147483648
    %v1059 = vxor.u32 %v1055, 2147483648
    %v1060 = vxor.u32 %v1056, 2147483648
    %v1061 = vmul.f32 %v1058, 1.442695
    %v1062 = vpow.pop %v1061
    %v1063 = vmul.f32 %v1059, 1.442695
    %v1064 = vpow.pop %v1063
    %v1065 = vmul.f32 %v1060, 1.442695
    %v1066 = vpow.pop %v1065
    %v1067 = vadd.f32 %v1062, 1.0
    %v1068 = vadd.f32 %v1064, 1.0
    %v1069 = vadd.f32 %v1066, 1.0
    %v1070 = vrcp.pop %v1067
    %v1071 = vmul.f32 %v1067, %v1070
    %v1072 = vsub.f32 1.0, %v1071
    %v1073 = vmul.f32 %v1070, %v1072
    %v1074 = vadd.f32 %v1070, %v1073
    %vm1075 = vweird.f32 %v1067
    %vm1076 = vweird.f32 %v1070
    %vm1077 = vmor %vm1075, %vm1076
    %v1078 = vsel %vm1077, %v1070, %v1074
    %v1079 = vand.u32 2147483647, %v1067
    %vm1080 = vcmp.eq.f32.partialorder %v1079, 8.507059e+37
    %v1081 = vand.u32 %v1067, 2147483648
    %v1082 = vor.u32 1.1754944e-38, %v1081
    %v1083 = vsel %vm1080, %v1082, %v1078
    %v1084 = vmul.f32 1.0, %v1083
    %v1085 = vrcp.pop %v1068
    %v1086 = vmul.f32 %v1068, %v1085
    %v1087 = vsub.f32 1.0, %v1086
    %v1088 = vmul.f32 %v1085, %v1087
    %v1089 = vadd.f32 %v1085, %v1088
    %vm1090 = vweird.f32 %v1068
    %vm1091 = vweird.f32 %v1085
    %vm1092 = vmor %vm1090, %vm1091
    %v1093 = vsel %vm1092, %v1085, %v1089
    %v1094 = vand.u32 2147483647, %v1068
    %vm1095 = vcmp.eq.f32.partialorder %v1094, 8.507059e+37
    %v1096 = vand.u32 %v1068, 2147483648
    %v1097 = vor.u32 1.1754944e-38, %v1096
    %v1098 = vsel %vm1095, %v1097, %v1093
    %v1099 = vmul.f32 1.0, %v1098
    %v1100 = vrcp.pop %v1069
    %v1101 = vmul.f32 %v1069, %v1100
    %v1102 = vsub.f32 1.0, %v1101
    %v1103 = vmul.f32 %v1100, %v1102
    %v1104 = vadd.f32 %v1100, %v1103
    %vm1105 = vweird.f32 %v1069
    %vm1106 = vweird.f32 %v1100
    %vm1107 = vmor %vm1105, %vm1106
    %v1108 = vsel %vm1107, %v1100, %v1104
    %v1109 = vand.u32 2147483647, %v1069
    %vm1110 = vcmp.eq.f32.partialorder %v1109, 8.507059e+37
    %v1111 = vand.u32 %v1069, 2147483648
    %v1112 = vor.u32 1.1754944e-38, %v1111
    %v1113 = vsel %vm1110, %v1112, %v1108
    %v1114 = vmul.f32 1.0, %v1113
    %v1115 = vtanh.pop %v1057
    %v1116 = vmul.f32 %v1099, %v967
    %v1117 = vmul.f32 %v1084, %v1115
    %v1118 = vadd.f32 %v1116, %v1117
    %v1119 = vtanh.pop %v1118
    %v1120 = vmul.f32 %v1114, %v1119
    %v1121 = vld [vmem:[#allocation2 + $0xc0] sm:$0xff]
    %v1122 = vld [vmem:[#allocation2 + $0xc8] sm:$0xff]
    %v1123 = vld [vmem:[#allocation2 + $0xd0] sm:$0xff]
    %v1124 = vld [vmem:[#allocation2 + $0xd8] sm:$0xff]
    %1125 = vmatpush.msra.mxu0 %v664
    %1126 = vmatpush.msra.mxu0 %v660
    %1127 = vmatpush.msra.mxu0 %v656
    %1128 = vmatpush.msra.mxu0 %v652
    %1129 = vmatpush.msra.mxu0 %v648
    %1130 = vmatpush.msra.mxu0 %v644
    %1131 = vmatpush.msra.mxu0 %v640
    %1132 = vmatpush.msra.mxu0 %v636
    %1133 = vmatpush.msra.mxu0 %v632
    %1134 = vmatpush.msra.mxu0 %v628
    %1135 = vmatpush.msra.mxu0 %v624
    %1136 = vmatpush.msra.mxu0 %v620
    %1137 = vmatpush.msra.mxu0 %v616
    %1138 = vmatpush.msra.mxu0 %v612
    %1139 = vmatpush.msra.mxu0 %v608
    %1140 = vmatpush.msra.mxu0 %v604
    %1141 = vmatmul.f32.gmra.mxu0 %v1120
    %v1142 = vpop.f32.mrf.mxu0
    %v1143 = vadd.f32 0.0, %v1142
    %1144 = vdwg.mxu0
    %1145 = vmatpush.msra.mxu0 %v665
    %1146 = vmatpush.msra.mxu0 %v661
    %1147 = vmatpush.msra.mxu0 %v657
    %1148 = vmatpush.msra.mxu0 %v653
    %1149 = vmatpush.msra.mxu0 %v649
    %1150 = vmatpush.msra.mxu0 %v645
    %1151 = vmatpush.msra.mxu0 %v641
    %1152 = vmatpush.msra.mxu0 %v637
    %1153 = vmatpush.msra.mxu0 %v633
    %1154 = vmatpush.msra.mxu0 %v629
    %1155 = vmatpush.msra.mxu0 %v625
    %1156 = vmatpush.msra.mxu0 %v621
    %1157 = vmatpush.msra.mxu0 %v617
    %1158 = vmatpush.msra.mxu0 %v613
    %1159 = vmatpush.msra.mxu0 %v609
    %1160 = vmatpush.msra.mxu0 %v605
    %1161 = vmatmul.f32.gmra.mxu0 %v1120
    %v1162 = vpop.f32.mrf.mxu0
    %v1163 = vadd.f32 0.0, %v1162
    %1164 = vdwg.mxu0
    %1165 = vmatpush.msra.mxu0 %v666
    %1166 = vmatpush.msra.mxu0 %v662
    %1167 = vmatpush.msra.mxu0 %v658
    %1168 = vmatpush.msra.mxu0 %v654
    %1169 = vmatpush.msra.mxu0 %v650
    %1170 = vmatpush.msra.mxu0 %v646
    %1171 = vmatpush.msra.mxu0 %v642
    %1172 = vmatpush.msra.mxu0 %v638
    %1173 = vmatpush.msra.mxu0 %v634
    %1174 = vmatpush.msra.mxu0 %v630
    %1175 = vmatpush.msra.mxu0 %v626
    %1176 = vmatpush.msra.mxu0 %v622
    %1177 = vmatpush.msra.mxu0 %v618
    %1178 = vmatpush.msra.mxu0 %v614
    %1179 = vmatpush.msra.mxu0 %v610
    %1180 = vmatpush.msra.mxu0 %v606
    %1181 = vmatmul.f32.gmra.mxu0 %v1120
    %v1182 = vpop.f32.mrf.mxu0
    %v1183 = vadd.f32 0.0, %v1182
    %1184 = vdwg.mxu0
    %1185 = vmatpush.msra.mxu0 %v667
    %1186 = vmatpush.msra.mxu0 %v663
    %1187 = vmatpush.msra.mxu0 %v659
    %1188 = vmatpush.msra.mxu0 %v655
    %1189 = vmatpush.msra.mxu0 %v651
    %1190 = vmatpush.msra.mxu0 %v647
    %1191 = vmatpush.msra.mxu0 %v643
    %1192 = vmatpush.msra.mxu0 %v639
    %1193 = vmatpush.msra.mxu0 %v635
    %1194 = vmatpush.msra.mxu0 %v631
    %1195 = vmatpush.msra.mxu0 %v627
    %1196 = vmatpush.msra.mxu0 %v623
    %1197 = vmatpush.msra.mxu0 %v619
    %1198 = vmatpush.msra.mxu0 %v615
    %1199 = vmatpush.msra.mxu0 %v611
    %1200 = vmatpush.msra.mxu0 %v607
    %1201 = vmatmul.f32.gmra.mxu0 %v1120
    %v1202 = vpop.f32.mrf.mxu0
    %v1203 = vadd.f32 0.0, %v1202
    %1204 = vdwg.mxu0
    %v1205 = vadd.f32 %v1121, %v1143
    %v1206 = vadd.f32 %v1122, %v1163
    %v1207 = vadd.f32 %v1123, %v1183
    %v1208 = vadd.f32 %v1124, %v1203
    %v1209 = vxor.u32 %v1205, 2147483648
    %v1210 = vxor.u32 %v1206, 2147483648
    %v1211 = vxor.u32 %v1207, 2147483648
    %v1212 = vmul.f32 %v1209, 1.442695
    %v1213 = vpow.pop %v1212
    %v1214 = vmul.f32 %v1210, 1.442695
    %v1215 = vpow.pop %v1214
    %v1216 = vmul.f32 %v1211, 1.442695
    %v1217 = vpow.pop %v1216
    %v1218 = vadd.f32 %v1213, 1.0
    %v1219 = vadd.f32 %v1215, 1.0
    %v1220 = vadd.f32 %v1217, 1.0
    %v1221 = vrcp.pop %v1218
    %v1222 = vmul.f32 %v1218, %v1221
    %v1223 = vsub.f32 1.0, %v1222
    %v1224 = vmul.f32 %v1221, %v1223
    %v1225 = vadd.f32 %v1221, %v1224
    %vm1226 = vweird.f32 %v1218
    %vm1227 = vweird.f32 %v1221
    %vm1228 = vmor %vm1226, %vm1227
    %v1229 = vsel %vm1228, %v1221, %v1225
    %v1230 = vand.u32 2147483647, %v1218
    %vm1231 = vcmp.eq.f32.partialorder %v1230, 8.507059e+37
    %v1232 = vand.u32 %v1218, 2147483648
    %v1233 = vor.u32 1.1754944e-38, %v1232
    %v1234 = vsel %vm1231, %v1233, %v1229
    %v1235 = vmul.f32 1.0, %v1234
    %v1236 = vrcp.pop %v1219
    %v1237 = vmul.f32 %v1219, %v1236
    %v1238 = vsub.f32 1.0, %v1237
    %v1239 = vmul.f32 %v1236, %v1238
    %v1240 = vadd.f32 %v1236, %v1239
    %vm1241 = vweird.f32 %v1219
    %vm1242 = vweird.f32 %v1236
    %vm1243 = vmor %vm1241, %vm1242
    %v1244 = vsel %vm1243, %v1236, %v1240
    %v1245 = vand.u32 2147483647, %v1219
    %vm1246 = vcmp.eq.f32.partialorder %v1245, 8.507059e+37
    %v1247 = vand.u32 %v1219, 2147483648
    %v1248 = vor.u32 1.1754944e-38, %v1247
    %v1249 = vsel %vm1246, %v1248, %v1244
    %v1250 = vmul.f32 1.0, %v1249
    %v1251 = vrcp.pop %v1220
    %v1252 = vmul.f32 %v1220, %v1251
    %v1253 = vsub.f32 1.0, %v1252
    %v1254 = vmul.f32 %v1251, %v1253
    %v1255 = vadd.f32 %v1251, %v1254
    %vm1256 = vweird.f32 %v1220
    %vm1257 = vweird.f32 %v1251
    %vm1258 = vmor %vm1256, %vm1257
    %v1259 = vsel %vm1258, %v1251, %v1255
    %v1260 = vand.u32 2147483647, %v1220
    %vm1261 = vcmp.eq.f32.partialorder %v1260, 8.507059e+37
    %v1262 = vand.u32 %v1220, 2147483648
    %v1263 = vor.u32 1.1754944e-38, %v1262
    %v1264 = vsel %vm1261, %v1263, %v1259
    %v1265 = vmul.f32 1.0, %v1264
    %v1266 = vtanh.pop %v1208
    %v1267 = vmul.f32 %v1250, %v1118
    %v1268 = vmul.f32 %v1235, %v1266
    %v1269 = vadd.f32 %v1267, %v1268
    %v1270 = vtanh.pop %v1269
    %v1271 = vmul.f32 %v1265, %v1270
    %v1272 = vld [vmem:[#allocation2 + $0x100] sm:$0xff]
    %v1273 = vld [vmem:[#allocation2 + $0x108] sm:$0xff]
    %v1274 = vld [vmem:[#allocation2 + $0x110] sm:$0xff]
    %v1275 = vld [vmem:[#allocation2 + $0x118] sm:$0xff]
    %1276 = vmatpush.msra.mxu0 %v664
    %1277 = vmatpush.msra.mxu0 %v660
    %1278 = vmatpush.msra.mxu0 %v656
    %1279 = vmatpush.msra.mxu0 %v652
    %1280 = vmatpush.msra.mxu0 %v648
    %1281 = vmatpush.msra.mxu0 %v644
    %1282 = vmatpush.msra.mxu0 %v640
    %1283 = vmatpush.msra.mxu0 %v636
    %1284 = vmatpush.msra.mxu0 %v632
    %1285 = vmatpush.msra.mxu0 %v628
    %1286 = vmatpush.msra.mxu0 %v624
    %1287 = vmatpush.msra.mxu0 %v620
    %1288 = vmatpush.msra.mxu0 %v616
    %1289 = vmatpush.msra.mxu0 %v612
    %1290 = vmatpush.msra.mxu0 %v608
    %1291 = vmatpush.msra.mxu0 %v604
    %1292 = vmatmul.f32.gmra.mxu0 %v1271
    %v1293 = vpop.f32.mrf.mxu0
    %v1294 = vadd.f32 0.0, %v1293
    %1295 = vdwg.mxu0
    %1296 = vmatpush.msra.mxu0 %v665
    %1297 = vmatpush.msra.mxu0 %v661
    %1298 = vmatpush.msra.mxu0 %v657
    %1299 = vmatpush.msra.mxu0 %v653
    %1300 = vmatpush.msra.mxu0 %v649
    %1301 = vmatpush.msra.mxu0 %v645
    %1302 = vmatpush.msra.mxu0 %v641
    %1303 = vmatpush.msra.mxu0 %v637
    %1304 = vmatpush.msra.mxu0 %v633
    %1305 = vmatpush.msra.mxu0 %v629
    %1306 = vmatpush.msra.mxu0 %v625
    %1307 = vmatpush.msra.mxu0 %v621
    %1308 = vmatpush.msra.mxu0 %v617
    %1309 = vmatpush.msra.mxu0 %v613
    %1310 = vmatpush.msra.mxu0 %v609
    %1311 = vmatpush.msra.mxu0 %v605
    %1312 = vmatmul.f32.gmra.mxu0 %v1271
    %v1313 = vpop.f32.mrf.mxu0
    %v1314 = vadd.f32 0.0, %v1313
    %1315 = vdwg.mxu0
    %1316 = vmatpush.msra.mxu0 %v666
    %1317 = vmatpush.msra.mxu0 %v662
    %1318 = vmatpush.msra.mxu0 %v658
    %1319 = vmatpush.msra.mxu0 %v654
    %1320 = vmatpush.msra.mxu0 %v650
    %1321 = vmatpush.msra.mxu0 %v646
    %1322 = vmatpush.msra.mxu0 %v642
    %1323 = vmatpush.msra.mxu0 %v638
    %1324 = vmatpush.msra.mxu0 %v634
    %1325 = vmatpush.msra.mxu0 %v630
    %1326 = vmatpush.msra.mxu0 %v626
    %1327 = vmatpush.msra.mxu0 %v622
    %1328 = vmatpush.msra.mxu0 %v618
    %1329 = vmatpush.msra.mxu0 %v614
    %1330 = vmatpush.msra.mxu0 %v610
    %1331 = vmatpush.msra.mxu0 %v606
    %1332 = vmatmul.f32.gmra.mxu0 %v1271
    %v1333 = vpop.f32.mrf.mxu0
    %v1334 = vadd.f32 0.0, %v1333
    %1335 = vdwg.mxu0
    %1336 = vmatpush.msra.mxu0 %v667
    %1337 = vmatpush.msra.mxu0 %v663
    %1338 = vmatpush.msra.mxu0 %v659
    %1339 = vmatpush.msra.mxu0 %v655
    %1340 = vmatpush.msra.mxu0 %v651
    %1341 = vmatpush.msra.mxu0 %v647
    %1342 = vmatpush.msra.mxu0 %v643
    %1343 = vmatpush.msra.mxu0 %v639
    %1344 = vmatpush.msra.mxu0 %v635
    %1345 = vmatpush.msra.mxu0 %v631
    %1346 = vmatpush.msra.mxu0 %v627
    %1347 = vmatpush.msra.mxu0 %v623
    %1348 = vmatpush.msra.mxu0 %v619
    %1349 = vmatpush.msra.mxu0 %v615
    %1350 = vmatpush.msra.mxu0 %v611
    %1351 = vmatpush.msra.mxu0 %v607
    %1352 = vmatmul.f32.gmra.mxu0 %v1271
    %v1353 = vpop.f32.mrf.mxu0
    %v1354 = vadd.f32 0.0, %v1353
    %1355 = vdwg.mxu0
    %v1356 = vadd.f32 %v1272, %v1294
    %v1357 = vadd.f32 %v1273, %v1314
    %v1358 = vadd.f32 %v1274, %v1334
    %v1359 = vadd.f32 %v1275, %v1354
    %v1360 = vxor.u32 %v1356, 2147483648
    %v1361 = vxor.u32 %v1357, 2147483648
    %v1362 = vxor.u32 %v1358, 2147483648
    %v1363 = vmul.f32 %v1360, 1.442695
    %v1364 = vpow.pop %v1363
    %v1365 = vmul.f32 %v1361, 1.442695
    %v1366 = vpow.pop %v1365
    %v1367 = vmul.f32 %v1362, 1.442695
    %v1368 = vpow.pop %v1367
    %v1369 = vadd.f32 %v1364, 1.0
    %v1370 = vadd.f32 %v1366, 1.0
    %v1371 = vadd.f32 %v1368, 1.0
    %v1372 = vrcp.pop %v1369
    %v1373 = vmul.f32 %v1369, %v1372
    %v1374 = vsub.f32 1.0, %v1373
    %v1375 = vmul.f32 %v1372, %v1374
    %v1376 = vadd.f32 %v1372, %v1375
    %vm1377 = vweird.f32 %v1369
    %vm1378 = vweird.f32 %v1372
    %vm1379 = vmor %vm1377, %vm1378
    %v1380 = vsel %vm1379, %v1372, %v1376
    %v1381 = vand.u32 2147483647, %v1369
    %vm1382 = vcmp.eq.f32.partialorder %v1381, 8.507059e+37
    %v1383 = vand.u32 %v1369, 2147483648
    %v1384 = vor.u32 1.1754944e-38, %v1383
    %v1385 = vsel %vm1382, %v1384, %v1380
    %v1386 = vmul.f32 1.0, %v1385
    %v1387 = vrcp.pop %v1370
    %v1388 = vmul.f32 %v1370, %v1387
    %v1389 = vsub.f32 1.0, %v1388
    %v1390 = vmul.f32 %v1387, %v1389
    %v1391 = vadd.f32 %v1387, %v1390
    %vm1392 = vweird.f32 %v1370
    %vm1393 = vweird.f32 %v1387
    %vm1394 = vmor %vm1392, %vm1393
    %v1395 = vsel %vm1394, %v1387, %v1391
    %v1396 = vand.u32 2147483647, %v1370
    %vm1397 = vcmp.eq.f32.partialorder %v1396, 8.507059e+37
    %v1398 = vand.u32 %v1370, 2147483648
    %v1399 = vor.u32 1.1754944e-38, %v1398
    %v1400 = vsel %vm1397, %v1399, %v1395
    %v1401 = vmul.f32 1.0, %v1400
    %v1402 = vrcp.pop %v1371
    %v1403 = vmul.f32 %v1371, %v1402
    %v1404 = vsub.f32 1.0, %v1403
    %v1405 = vmul.f32 %v1402, %v1404
    %v1406 = vadd.f32 %v1402, %v1405
    %vm1407 = vweird.f32 %v1371
    %vm1408 = vweird.f32 %v1402
    %vm1409 = vmor %vm1407, %vm1408
    %v1410 = vsel %vm1409, %v1402, %v1406
    %v1411 = vand.u32 2147483647, %v1371
    %vm1412 = vcmp.eq.f32.partialorder %v1411, 8.507059e+37
    %v1413 = vand.u32 %v1371, 2147483648
    %v1414 = vor.u32 1.1754944e-38, %v1413
    %v1415 = vsel %vm1412, %v1414, %v1410
    %v1416 = vmul.f32 1.0, %v1415
    %v1417 = vtanh.pop %v1359
    %v1418 = vmul.f32 %v1401, %v1269
    %v1419 = vmul.f32 %v1386, %v1417
    %v1420 = vadd.f32 %v1418, %v1419
    %v1421 = vtanh.pop %v1420
    %v1422 = vmul.f32 %v1416, %v1421
    %v1423 = vld [vmem:[#allocation2 + $0x140] sm:$0xff]
    %v1424 = vld [vmem:[#allocation2 + $0x148] sm:$0xff]
    %v1425 = vld [vmem:[#allocation2 + $0x150] sm:$0xff]
    %v1426 = vld [vmem:[#allocation2 + $0x158] sm:$0xff]
    %1427 = vmatpush.msra.mxu0 %v664
    %1428 = vmatpush.msra.mxu0 %v660
    %1429 = vmatpush.msra.mxu0 %v656
    %1430 = vmatpush.msra.mxu0 %v652
    %1431 = vmatpush.msra.mxu0 %v648
    %1432 = vmatpush.msra.mxu0 %v644
    %1433 = vmatpush.msra.mxu0 %v640
    %1434 = vmatpush.msra.mxu0 %v636
    %1435 = vmatpush.msra.mxu0 %v632
    %1436 = vmatpush.msra.mxu0 %v628
    %1437 = vmatpush.msra.mxu0 %v624
    %1438 = vmatpush.msra.mxu0 %v620
    %1439 = vmatpush.msra.mxu0 %v616
    %1440 = vmatpush.msra.mxu0 %v612
    %1441 = vmatpush.msra.mxu0 %v608
    %1442 = vmatpush.msra.mxu0 %v604
    %1443 = vmatmul.f32.gmra.mxu0 %v1422
    %v1444 = vpop.f32.mrf.mxu0
    %v1445 = vadd.f32 0.0, %v1444
    %1446 = vdwg.mxu0
    %1447 = vmatpush.msra.mxu0 %v665
    %1448 = vmatpush.msra.mxu0 %v661
    %1449 = vmatpush.msra.mxu0 %v657
    %1450 = vmatpush.msra.mxu0 %v653
    %1451 = vmatpush.msra.mxu0 %v649
    %1452 = vmatpush.msra.mxu0 %v645
    %1453 = vmatpush.msra.mxu0 %v641
    %1454 = vmatpush.msra.mxu0 %v637
    %1455 = vmatpush.msra.mxu0 %v633
    %1456 = vmatpush.msra.mxu0 %v629
    %1457 = vmatpush.msra.mxu0 %v625
    %1458 = vmatpush.msra.mxu0 %v621
    %1459 = vmatpush.msra.mxu0 %v617
    %1460 = vmatpush.msra.mxu0 %v613
    %1461 = vmatpush.msra.mxu0 %v609
    %1462 = vmatpush.msra.mxu0 %v605
    %1463 = vmatmul.f32.gmra.mxu0 %v1422
    %v1464 = vpop.f32.mrf.mxu0
    %v1465 = vadd.f32 0.0, %v1464
    %1466 = vdwg.mxu0
    %1467 = vmatpush.msra.mxu0 %v666
    %1468 = vmatpush.msra.mxu0 %v662
    %1469 = vmatpush.msra.mxu0 %v658
    %1470 = vmatpush.msra.mxu0 %v654
    %1471 = vmatpush.msra.mxu0 %v650
    %1472 = vmatpush.msra.mxu0 %v646
    %1473 = vmatpush.msra.mxu0 %v642
    %1474 = vmatpush.msra.mxu0 %v638
    %1475 = vmatpush.msra.mxu0 %v634
    %1476 = vmatpush.msra.mxu0 %v630
    %1477 = vmatpush.msra.mxu0 %v626
    %1478 = vmatpush.msra.mxu0 %v622
    %1479 = vmatpush.msra.mxu0 %v618
    %1480 = vmatpush.msra.mxu0 %v614
    %1481 = vmatpush.msra.mxu0 %v610
    %1482 = vmatpush.msra.mxu0 %v606
    %1483 = vmatmul.f32.gmra.mxu0 %v1422
    %v1484 = vpop.f32.mrf.mxu0
    %v1485 = vadd.f32 0.0, %v1484
    %1486 = vdwg.mxu0
    %1487 = vmatpush.msra.mxu0 %v667
    %1488 = vmatpush.msra.mxu0 %v663
    %1489 = vmatpush.msra.mxu0 %v659
    %1490 = vmatpush.msra.mxu0 %v655
    %1491 = vmatpush.msra.mxu0 %v651
    %1492 = vmatpush.msra.mxu0 %v647
    %1493 = vmatpush.msra.mxu0 %v643
    %1494 = vmatpush.msra.mxu0 %v639
    %1495 = vmatpush.msra.mxu0 %v635
    %1496 = vmatpush.msra.mxu0 %v631
    %1497 = vmatpush.msra.mxu0 %v627
    %1498 = vmatpush.msra.mxu0 %v623
    %1499 = vmatpush.msra.mxu0 %v619
    %1500 = vmatpush.msra.mxu0 %v615
    %1501 = vmatpush.msra.mxu0 %v611
    %1502 = vmatpush.msra.mxu0 %v607
    %1503 = vmatmul.f32.gmra.mxu0 %v1422
    %v1504 = vpop.f32.mrf.mxu0
    %v1505 = vadd.f32 0.0, %v1504
    %1506 = vdwg.mxu0
    %v1507 = vadd.f32 %v1423, %v1445
    %v1508 = vadd.f32 %v1424, %v1465
    %v1509 = vadd.f32 %v1425, %v1485
    %v1510 = vadd.f32 %v1426, %v1505
    %v1511 = vxor.u32 %v1507, 2147483648
    %v1512 = vxor.u32 %v1508, 2147483648
    %v1513 = vxor.u32 %v1509, 2147483648
    %v1514 = vmul.f32 %v1511, 1.442695
    %v1515 = vpow.pop %v1514
    %v1516 = vmul.f32 %v1512, 1.442695
    %v1517 = vpow.pop %v1516
    %v1518 = vmul.f32 %v1513, 1.442695
    %v1519 = vpow.pop %v1518
    %v1520 = vadd.f32 %v1515, 1.0
    %v1521 = vadd.f32 %v1517, 1.0
    %v1522 = vadd.f32 %v1519, 1.0
    %v1523 = vrcp.pop %v1520
    %v1524 = vmul.f32 %v1520, %v1523
    %v1525 = vsub.f32 1.0, %v1524
    %v1526 = vmul.f32 %v1523, %v1525
    %v1527 = vadd.f32 %v1523, %v1526
    %vm1528 = vweird.f32 %v1520
    %vm1529 = vweird.f32 %v1523
    %vm1530 = vmor %vm1528, %vm1529
    %v1531 = vsel %vm1530, %v1523, %v1527
    %v1532 = vand.u32 2147483647, %v1520
    %vm1533 = vcmp.eq.f32.partialorder %v1532, 8.507059e+37
    %v1534 = vand.u32 %v1520, 2147483648
    %v1535 = vor.u32 1.1754944e-38, %v1534
    %v1536 = vsel %vm1533, %v1535, %v1531
    %v1537 = vmul.f32 1.0, %v1536
    %v1538 = vrcp.pop %v1521
    %v1539 = vmul.f32 %v1521, %v1538
    %v1540 = vsub.f32 1.0, %v1539
    %v1541 = vmul.f32 %v1538, %v1540
    %v1542 = vadd.f32 %v1538, %v1541
    %vm1543 = vweird.f32 %v1521
    %vm1544 = vweird.f32 %v1538
    %vm1545 = vmor %vm1543, %vm1544
    %v1546 = vsel %vm1545, %v1538, %v1542
    %v1547 = vand.u32 2147483647, %v1521
    %vm1548 = vcmp.eq.f32.partialorder %v1547, 8.507059e+37
    %v1549 = vand.u32 %v1521, 2147483648
    %v1550 = vor.u32 1.1754944e-38, %v1549
    %v1551 = vsel %vm1548, %v1550, %v1546
    %v1552 = vmul.f32 1.0, %v1551
    %v1553 = vrcp.pop %v1522
    %v1554 = vmul.f32 %v1522, %v1553
    %v1555 = vsub.f32 1.0, %v1554
    %v1556 = vmul.f32 %v1553, %v1555
    %v1557 = vadd.f32 %v1553, %v1556
    %vm1558 = vweird.f32 %v1522
    %vm1559 = vweird.f32 %v1553
    %vm1560 = vmor %vm1558, %vm1559
    %v1561 = vsel %vm1560, %v1553, %v1557
    %v1562 = vand.u32 2147483647, %v1522
    %vm1563 = vcmp.eq.f32.partialorder %v1562, 8.507059e+37
    %v1564 = vand.u32 %v1522, 2147483648
    %v1565 = vor.u32 1.1754944e-38, %v1564
    %v1566 = vsel %vm1563, %v1565, %v1561
    %v1567 = vmul.f32 1.0, %v1566
    %v1568 = vtanh.pop %v1510
    %v1569 = vmul.f32 %v1552, %v1420
    %v1570 = vmul.f32 %v1537, %v1568
    %v1571 = vadd.f32 %v1569, %v1570
    %v1572 = vtanh.pop %v1571
    %v1573 = vmul.f32 %v1567, %v1572
    %v1574 = vld [vmem:[#allocation2 + $0x180] sm:$0xff]
    %v1575 = vld [vmem:[#allocation2 + $0x188] sm:$0xff]
    %v1576 = vld [vmem:[#allocation2 + $0x190] sm:$0xff]
    %v1577 = vld [vmem:[#allocation2 + $0x198] sm:$0xff]
    %1578 = vmatpush.msra.mxu0 %v664
    %1579 = vmatpush.msra.mxu0 %v660
    %1580 = vmatpush.msra.mxu0 %v656
    %1581 = vmatpush.msra.mxu0 %v652
    %1582 = vmatpush.msra.mxu0 %v648
    %1583 = vmatpush.msra.mxu0 %v644
    %1584 = vmatpush.msra.mxu0 %v640
    %1585 = vmatpush.msra.mxu0 %v636
    %1586 = vmatpush.msra.mxu0 %v632
    %1587 = vmatpush.msra.mxu0 %v628
    %1588 = vmatpush.msra.mxu0 %v624
    %1589 = vmatpush.msra.mxu0 %v620
    %1590 = vmatpush.msra.mxu0 %v616
    %1591 = vmatpush.msra.mxu0 %v612
    %1592 = vmatpush.msra.mxu0 %v608
    %1593 = vmatpush.msra.mxu0 %v604
    %1594 = vmatmul.f32.gmra.mxu0 %v1573
    %v1595 = vpop.f32.mrf.mxu0
    %v1596 = vadd.f32 0.0, %v1595
    %1597 = vdwg.mxu0
    %1598 = vmatpush.msra.mxu0 %v665
    %1599 = vmatpush.msra.mxu0 %v661
    %1600 = vmatpush.msra.mxu0 %v657
    %1601 = vmatpush.msra.mxu0 %v653
    %1602 = vmatpush.msra.mxu0 %v649
    %1603 = vmatpush.msra.mxu0 %v645
    %1604 = vmatpush.msra.mxu0 %v641
    %1605 = vmatpush.msra.mxu0 %v637
    %1606 = vmatpush.msra.mxu0 %v633
    %1607 = vmatpush.msra.mxu0 %v629
    %1608 = vmatpush.msra.mxu0 %v625
    %1609 = vmatpush.msra.mxu0 %v621
    %1610 = vmatpush.msra.mxu0 %v617
    %1611 = vmatpush.msra.mxu0 %v613
    %1612 = vmatpush.msra.mxu0 %v609
    %1613 = vmatpush.msra.mxu0 %v605
    %1614 = vmatmul.f32.gmra.mxu0 %v1573
    %v1615 = vpop.f32.mrf.mxu0
    %v1616 = vadd.f32 0.0, %v1615
    %1617 = vdwg.mxu0
    %1618 = vmatpush.msra.mxu0 %v666
    %1619 = vmatpush.msra.mxu0 %v662
    %1620 = vmatpush.msra.mxu0 %v658
    %1621 = vmatpush.msra.mxu0 %v654
    %1622 = vmatpush.msra.mxu0 %v650
    %1623 = vmatpush.msra.mxu0 %v646
    %1624 = vmatpush.msra.mxu0 %v642
    %1625 = vmatpush.msra.mxu0 %v638
    %1626 = vmatpush.msra.mxu0 %v634
    %1627 = vmatpush.msra.mxu0 %v630
    %1628 = vmatpush.msra.mxu0 %v626
    %1629 = vmatpush.msra.mxu0 %v622
    %1630 = vmatpush.msra.mxu0 %v618
    %1631 = vmatpush.msra.mxu0 %v614
    %1632 = vmatpush.msra.mxu0 %v610
    %1633 = vmatpush.msra.mxu0 %v606
    %1634 = vmatmul.f32.gmra.mxu0 %v1573
    %v1635 = vpop.f32.mrf.mxu0
    %v1636 = vadd.f32 0.0, %v1635
    %1637 = vdwg.mxu0
    %1638 = vmatpush.msra.mxu0 %v667
    %1639 = vmatpush.msra.mxu0 %v663
    %1640 = vmatpush.msra.mxu0 %v659
    %1641 = vmatpush.msra.mxu0 %v655
    %1642 = vmatpush.msra.mxu0 %v651
    %1643 = vmatpush.msra.mxu0 %v647
    %1644 = vmatpush.msra.mxu0 %v643
    %1645 = vmatpush.msra.mxu0 %v639
    %1646 = vmatpush.msra.mxu0 %v635
    %1647 = vmatpush.msra.mxu0 %v631
    %1648 = vmatpush.msra.mxu0 %v627
    %1649 = vmatpush.msra.mxu0 %v623
    %1650 = vmatpush.msra.mxu0 %v619
    %1651 = vmatpush.msra.mxu0 %v615
    %1652 = vmatpush.msra.mxu0 %v611
    %1653 = vmatpush.msra.mxu0 %v607
    %1654 = vmatmul.f32.gmra.mxu0 %v1573
    %v1655 = vpop.f32.mrf.mxu0
    %v1656 = vadd.f32 0.0, %v1655
    %1657 = vdwg.mxu0
    %v1658 = vadd.f32 %v1574, %v1596
    %v1659 = vadd.f32 %v1575, %v1616
    %v1660 = vadd.f32 %v1576, %v1636
    %v1661 = vadd.f32 %v1577, %v1656
    %v1662 = vxor.u32 %v1658, 2147483648
    %v1663 = vxor.u32 %v1659, 2147483648
    %v1664 = vxor.u32 %v1660, 2147483648
    %v1665 = vmul.f32 %v1662, 1.442695
    %v1666 = vpow.pop %v1665
    %v1667 = vmul.f32 %v1663, 1.442695
    %v1668 = vpow.pop %v1667
    %v1669 = vmul.f32 %v1664, 1.442695
    %v1670 = vpow.pop %v1669
    %v1671 = vadd.f32 %v1666, 1.0
    %v1672 = vadd.f32 %v1668, 1.0
    %v1673 = vadd.f32 %v1670, 1.0
    %v1674 = vrcp.pop %v1671
    %v1675 = vmul.f32 %v1671, %v1674
    %v1676 = vsub.f32 1.0, %v1675
    %v1677 = vmul.f32 %v1674, %v1676
    %v1678 = vadd.f32 %v1674, %v1677
    %vm1679 = vweird.f32 %v1671
    %vm1680 = vweird.f32 %v1674
    %vm1681 = vmor %vm1679, %vm1680
    %v1682 = vsel %vm1681, %v1674, %v1678
    %v1683 = vand.u32 2147483647, %v1671
    %vm1684 = vcmp.eq.f32.partialorder %v1683, 8.507059e+37
    %v1685 = vand.u32 %v1671, 2147483648
    %v1686 = vor.u32 1.1754944e-38, %v1685
    %v1687 = vsel %vm1684, %v1686, %v1682
    %v1688 = vmul.f32 1.0, %v1687
    %v1689 = vrcp.pop %v1672
    %v1690 = vmul.f32 %v1672, %v1689
    %v1691 = vsub.f32 1.0, %v1690
    %v1692 = vmul.f32 %v1689, %v1691
    %v1693 = vadd.f32 %v1689, %v1692
    %vm1694 = vweird.f32 %v1672
    %vm1695 = vweird.f32 %v1689
    %vm1696 = vmor %vm1694, %vm1695
    %v1697 = vsel %vm1696, %v1689, %v1693
    %v1698 = vand.u32 2147483647, %v1672
    %vm1699 = vcmp.eq.f32.partialorder %v1698, 8.507059e+37
    %v1700 = vand.u32 %v1672, 2147483648
    %v1701 = vor.u32 1.1754944e-38, %v1700
    %v1702 = vsel %vm1699, %v1701, %v1697
    %v1703 = vmul.f32 1.0, %v1702
    %v1704 = vrcp.pop %v1673
    %v1705 = vmul.f32 %v1673, %v1704
    %v1706 = vsub.f32 1.0, %v1705
    %v1707 = vmul.f32 %v1704, %v1706
    %v1708 = vadd.f32 %v1704, %v1707
    %vm1709 = vweird.f32 %v1673
    %vm1710 = vweird.f32 %v1704
    %vm1711 = vmor %vm1709, %vm1710
    %v1712 = vsel %vm1711, %v1704, %v1708
    %v1713 = vand.u32 2147483647, %v1673
    %vm1714 = vcmp.eq.f32.partialorder %v1713, 8.507059e+37
    %v1715 = vand.u32 %v1673, 2147483648
    %v1716 = vor.u32 1.1754944e-38, %v1715
    %v1717 = vsel %vm1714, %v1716, %v1712
    %v1718 = vmul.f32 1.0, %v1717
    %v1719 = vtanh.pop %v1661
    %v1720 = vmul.f32 %v1703, %v1571
    %v1721 = vmul.f32 %v1688, %v1719
    %v1722 = vadd.f32 %v1720, %v1721
    %v1723 = vtanh.pop %v1722
    %v1724 = vmul.f32 %v1718, %v1723
    %v1725 = vld [vmem:[#allocation2 + $0x1c0] sm:$0xff]
    %v1726 = vld [vmem:[#allocation2 + $0x1c8] sm:$0xff]
    %v1727 = vld [vmem:[#allocation2 + $0x1d0] sm:$0xff]
    %v1728 = vld [vmem:[#allocation2 + $0x1d8] sm:$0xff]
    %1729 = vmatpush.msra.mxu0 %v664
    %1730 = vmatpush.msra.mxu0 %v660
    %1731 = vmatpush.msra.mxu0 %v656
    %1732 = vmatpush.msra.mxu0 %v652
    %1733 = vmatpush.msra.mxu0 %v648
    %1734 = vmatpush.msra.mxu0 %v644
    %1735 = vmatpush.msra.mxu0 %v640
    %1736 = vmatpush.msra.mxu0 %v636
    %1737 = vmatpush.msra.mxu0 %v632
    %1738 = vmatpush.msra.mxu0 %v628
    %1739 = vmatpush.msra.mxu0 %v624
    %1740 = vmatpush.msra.mxu0 %v620
    %1741 = vmatpush.msra.mxu0 %v616
    %1742 = vmatpush.msra.mxu0 %v612
    %1743 = vmatpush.msra.mxu0 %v608
    %1744 = vmatpush.msra.mxu0 %v604
    %1745 = vmatmul.f32.gmra.mxu0 %v1724
    %v1746 = vpop.f32.mrf.mxu0
    %v1747 = vadd.f32 0.0, %v1746
    %1748 = vdwg.mxu0
    %1749 = vmatpush.msra.mxu0 %v665
    %1750 = vmatpush.msra.mxu0 %v661
    %1751 = vmatpush.msra.mxu0 %v657
    %1752 = vmatpush.msra.mxu0 %v653
    %1753 = vmatpush.msra.mxu0 %v649
    %1754 = vmatpush.msra.mxu0 %v645
    %1755 = vmatpush.msra.mxu0 %v641
    %1756 = vmatpush.msra.mxu0 %v637
    %1757 = vmatpush.msra.mxu0 %v633
    %1758 = vmatpush.msra.mxu0 %v629
    %1759 = vmatpush.msra.mxu0 %v625
    %1760 = vmatpush.msra.mxu0 %v621
    %1761 = vmatpush.msra.mxu0 %v617
    %1762 = vmatpush.msra.mxu0 %v613
    %1763 = vmatpush.msra.mxu0 %v609
    %1764 = vmatpush.msra.mxu0 %v605
    %1765 = vmatmul.f32.gmra.mxu0 %v1724
    %v1766 = vpop.f32.mrf.mxu0
    %v1767 = vadd.f32 0.0, %v1766
    %1768 = vdwg.mxu0
    %1769 = vmatpush.msra.mxu0 %v666
    %1770 = vmatpush.msra.mxu0 %v662
    %1771 = vmatpush.msra.mxu0 %v658
    %1772 = vmatpush.msra.mxu0 %v654
    %1773 = vmatpush.msra.mxu0 %v650
    %1774 = vmatpush.msra.mxu0 %v646
    %1775 = vmatpush.msra.mxu0 %v642
    %1776 = vmatpush.msra.mxu0 %v638
    %1777 = vmatpush.msra.mxu0 %v634
    %1778 = vmatpush.msra.mxu0 %v630
    %1779 = vmatpush.msra.mxu0 %v626
    %1780 = vmatpush.msra.mxu0 %v622
    %1781 = vmatpush.msra.mxu0 %v618
    %1782 = vmatpush.msra.mxu0 %v614
    %1783 = vmatpush.msra.mxu0 %v610
    %1784 = vmatpush.msra.mxu0 %v606
    %1785 = vmatmul.f32.gmra.mxu0 %v1724
    %v1786 = vpop.f32.mrf.mxu0
    %v1787 = vadd.f32 0.0, %v1786
    %1788 = vdwg.mxu0
    %1789 = vmatpush.msra.mxu0 %v667
    %1790 = vmatpush.msra.mxu0 %v663
    %1791 = vmatpush.msra.mxu0 %v659
    %1792 = vmatpush.msra.mxu0 %v655
    %1793 = vmatpush.msra.mxu0 %v651
    %1794 = vmatpush.msra.mxu0 %v647
    %1795 = vmatpush.msra.mxu0 %v643
    %1796 = vmatpush.msra.mxu0 %v639
    %1797 = vmatpush.msra.mxu0 %v635
    %1798 = vmatpush.msra.mxu0 %v631
    %1799 = vmatpush.msra.mxu0 %v627
    %1800 = vmatpush.msra.mxu0 %v623
    %1801 = vmatpush.msra.mxu0 %v619
    %1802 = vmatpush.msra.mxu0 %v615
    %1803 = vmatpush.msra.mxu0 %v611
    %1804 = vmatpush.msra.mxu0 %v607
    %1805 = vmatmul.f32.gmra.mxu0 %v1724
    %v1806 = vpop.f32.mrf.mxu0
    %v1807 = vadd.f32 0.0, %v1806
    %1808 = vdwg.mxu0
    %v1809 = vadd.f32 %v1725, %v1747
    %v1810 = vadd.f32 %v1726, %v1767
    %v1811 = vadd.f32 %v1727, %v1787
    %v1812 = vadd.f32 %v1728, %v1807
    %v1813 = vxor.u32 %v1809, 2147483648
    %v1814 = vxor.u32 %v1810, 2147483648
    %v1815 = vxor.u32 %v1811, 2147483648
    %v1816 = vmul.f32 %v1813, 1.442695
    %v1817 = vpow.pop %v1816
    %v1818 = vmul.f32 %v1814, 1.442695
    %v1819 = vpow.pop %v1818
    %v1820 = vmul.f32 %v1815, 1.442695
    %v1821 = vpow.pop %v1820
    %v1822 = vadd.f32 %v1817, 1.0
    %v1823 = vadd.f32 %v1819, 1.0
    %v1824 = vadd.f32 %v1821, 1.0
    %v1825 = vrcp.pop %v1822
    %v1826 = vmul.f32 %v1822, %v1825
    %v1827 = vsub.f32 1.0, %v1826
    %v1828 = vmul.f32 %v1825, %v1827
    %v1829 = vadd.f32 %v1825, %v1828
    %vm1830 = vweird.f32 %v1822
    %vm1831 = vweird.f32 %v1825
    %vm1832 = vmor %vm1830, %vm1831
    %v1833 = vsel %vm1832, %v1825, %v1829
    %v1834 = vand.u32 2147483647, %v1822
    %vm1835 = vcmp.eq.f32.partialorder %v1834, 8.507059e+37
    %v1836 = vand.u32 %v1822, 2147483648
    %v1837 = vor.u32 1.1754944e-38, %v1836
    %v1838 = vsel %vm1835, %v1837, %v1833
    %v1839 = vmul.f32 1.0, %v1838
    %v1840 = vrcp.pop %v1823
    %v1841 = vmul.f32 %v1823, %v1840
    %v1842 = vsub.f32 1.0, %v1841
    %v1843 = vmul.f32 %v1840, %v1842
    %v1844 = vadd.f32 %v1840, %v1843
    %vm1845 = vweird.f32 %v1823
    %vm1846 = vweird.f32 %v1840
    %vm1847 = vmor %vm1845, %vm1846
    %v1848 = vsel %vm1847, %v1840, %v1844
    %v1849 = vand.u32 2147483647, %v1823
    %vm1850 = vcmp.eq.f32.partialorder %v1849, 8.507059e+37
    %v1851 = vand.u32 %v1823, 2147483648
    %v1852 = vor.u32 1.1754944e-38, %v1851
    %v1853 = vsel %vm1850, %v1852, %v1848
    %v1854 = vmul.f32 1.0, %v1853
    %v1855 = vrcp.pop %v1824
    %v1856 = vmul.f32 %v1824, %v1855
    %v1857 = vsub.f32 1.0, %v1856
    %v1858 = vmul.f32 %v1855, %v1857
    %v1859 = vadd.f32 %v1855, %v1858
    %vm1860 = vweird.f32 %v1824
    %vm1861 = vweird.f32 %v1855
    %vm1862 = vmor %vm1860, %vm1861
    %v1863 = vsel %vm1862, %v1855, %v1859
    %v1864 = vand.u32 2147483647, %v1824
    %vm1865 = vcmp.eq.f32.partialorder %v1864, 8.507059e+37
    %v1866 = vand.u32 %v1824, 2147483648
    %v1867 = vor.u32 1.1754944e-38, %v1866
    %v1868 = vsel %vm1865, %v1867, %v1863
    %v1869 = vmul.f32 1.0, %v1868
    %v1870 = vtanh.pop %v1812
    %v1871 = vmul.f32 %v1854, %v1722
    %v1872 = vmul.f32 %v1839, %v1870
    %v1873 = vadd.f32 %v1871, %v1872
    %v1874 = vtanh.pop %v1873
    %v1875 = vmul.f32 %v1869, %v1874
    %v1876 = vld [vmem:[#allocation2 + $0x1e0] sm:$0xff]
    %v1877 = vld [vmem:[#allocation2 + $0x1f0] sm:$0xff]
    %v1878 = vld [vmem:[#allocation2 + $0x1f8] sm:$0xff]
    %v1879 = vxor.u32 %v1876, 2147483648
    %v1880 = vxor.u32 %v1877, 2147483648
    %v1881 = vmul.f32 %v1879, 1.442695
    %v1882 = vpow.pop %v1881
    %v1883 = vmul.f32 %v1880, 1.442695
    %v1884 = vpow.pop %v1883
    %v1885 = vadd.f32 %v1882, 1.0
    %v1886 = vadd.f32 %v1884, 1.0
    %v1887 = vrcp.pop %v1885
    %v1888 = vmul.f32 %v1885, %v1887
    %v1889 = vsub.f32 1.0, %v1888
    %v1890 = vmul.f32 %v1887, %v1889
    %v1891 = vadd.f32 %v1887, %v1890
    %vm1892 = vweird.f32 %v1885
    %vm1893 = vweird.f32 %v1887
    %vm1894 = vmor %vm1892, %vm1893
    %v1895 = vsel %vm1894, %v1887, %v1891
    %v1896 = vand.u32 2147483647, %v1885
    %vm1897 = vcmp.eq.f32.partialorder %v1896, 8.507059e+37
    %v1898 = vand.u32 %v1885, 2147483648
    %v1899 = vor.u32 1.1754944e-38, %v1898
    %v1900 = vsel %vm1897, %v1899, %v1895
    %v1901 = vmul.f32 1.0, %v1900
    %v1902 = vrcp.pop %v1886
    %v1903 = vmul.f32 %v1886, %v1902
    %v1904 = vsub.f32 1.0, %v1903
    %v1905 = vmul.f32 %v1902, %v1904
    %v1906 = vadd.f32 %v1902, %v1905
    %vm1907 = vweird.f32 %v1886
    %vm1908 = vweird.f32 %v1902
    %vm1909 = vmor %vm1907, %vm1908
    %v1910 = vsel %vm1909, %v1902, %v1906
    %v1911 = vand.u32 2147483647, %v1886
    %vm1912 = vcmp.eq.f32.partialorder %v1911, 8.507059e+37
    %v1913 = vand.u32 %v1886, 2147483648
    %v1914 = vor.u32 1.1754944e-38, %v1913
    %v1915 = vsel %vm1912, %v1914, %v1910
    %v1916 = vmul.f32 1.0, %v1915
    %v1917 = vtanh.pop %v1878
    %v1918 = vmul.f32 %v1901, %v1917
    %v1919 = vtanh.pop %v1918
    %v1920 = vmul.f32 %v1916, %v1919
    %v1921 = vld [vmem:[%s4] sm:$0xff]
    %v1922 = vld [vmem:[%s4 + $0x8] sm:$0xff]
    %v1923 = vld [vmem:[%s4 + $0x10] sm:$0xff]
    %v1924 = vld [vmem:[%s4 + $0x18] sm:$0xff]
    %v1925 = vld [vmem:[%s4 + $0x20] sm:$0xff]
    %v1926 = vld [vmem:[%s4 + $0x28] sm:$0xff]
    %v1927 = vld [vmem:[%s4 + $0x30] sm:$0xff]
    %v1928 = vld [vmem:[%s4 + $0x38] sm:$0xff]
    %v1929 = vld [vmem:[%s4 + $0x40] sm:$0xff]
    %v1930 = vld [vmem:[%s4 + $0x48] sm:$0xff]
    %v1931 = vld [vmem:[%s4 + $0x50] sm:$0xff]
    %v1932 = vld [vmem:[%s4 + $0x58] sm:$0xff]
    %v1933 = vld [vmem:[%s4 + $0x60] sm:$0xff]
    %v1934 = vld [vmem:[%s4 + $0x68] sm:$0xff]
    %v1935 = vld [vmem:[%s4 + $0x70] sm:$0xff]
    %v1936 = vld [vmem:[%s4 + $0x78] sm:$0xff]
    %v1937 = vld [vmem:[%s5] sm:$0xff]
    %v1938 = vld [vmem:[%s5 + $0x8] sm:$0xff]
    %v1939 = vld [vmem:[%s5 + $0x10] sm:$0xff]
    %v1940 = vld [vmem:[%s5 + $0x18] sm:$0xff]
    %v1941 = vld [vmem:[%s5 + $0x20] sm:$0xff]
    %v1942 = vld [vmem:[%s5 + $0x28] sm:$0xff]
    %v1943 = vld [vmem:[%s5 + $0x30] sm:$0xff]
    %v1944 = vld [vmem:[%s5 + $0x38] sm:$0xff]
    %v1945 = vld [vmem:[%s5 + $0x40] sm:$0xff]
    %v1946 = vld [vmem:[%s5 + $0x48] sm:$0xff]
    %v1947 = vld [vmem:[%s5 + $0x50] sm:$0xff]
    %v1948 = vld [vmem:[%s5 + $0x58] sm:$0xff]
    %v1949 = vld [vmem:[%s5 + $0x60] sm:$0xff]
    %v1950 = vld [vmem:[%s5 + $0x68] sm:$0xff]
    %v1951 = vld [vmem:[%s5 + $0x70] sm:$0xff]
    %v1952 = vld [vmem:[%s5 + $0x78] sm:$0xff]
    %1953 = vmatpush.msra.mxu0 %v1952
    %1954 = vmatpush.msra.mxu0 %v1951
    %1955 = vmatpush.msra.mxu0 %v1950
    %1956 = vmatpush.msra.mxu0 %v1949
    %1957 = vmatpush.msra.mxu0 %v1948
    %1958 = vmatpush.msra.mxu0 %v1947
    %1959 = vmatpush.msra.mxu0 %v1946
    %1960 = vmatpush.msra.mxu0 %v1945
    %1961 = vmatpush.msra.mxu0 %v1944
    %1962 = vmatpush.msra.mxu0 %v1943
    %1963 = vmatpush.msra.mxu0 %v1942
    %1964 = vmatpush.msra.mxu0 %v1941
    %1965 = vmatpush.msra.mxu0 %v1940
    %1966 = vmatpush.msra.mxu0 %v1939
    %1967 = vmatpush.msra.mxu0 %v1938
    %1968 = vmatpush.msra.mxu0 %v1937
    %1969 = vmatmul.f32.gmra.mxu0 %v1920
    %v1970 = vpop.f32.mrf.mxu0
    %v1971 = vadd.f32 0.0, %v1970
    %1972 = vdwg.mxu0
    %1973 = vmatpush.msra.mxu0 %v1936
    %1974 = vmatpush.msra.mxu0 %v1935
    %1975 = vmatpush.msra.mxu0 %v1934
    %1976 = vmatpush.msra.mxu0 %v1933
    %1977 = vmatpush.msra.mxu0 %v1932
    %1978 = vmatpush.msra.mxu0 %v1931
    %1979 = vmatpush.msra.mxu0 %v1930
    %1980 = vmatpush.msra.mxu0 %v1929
    %1981 = vmatpush.msra.mxu0 %v1928
    %1982 = vmatpush.msra.mxu0 %v1927
    %1983 = vmatpush.msra.mxu0 %v1926
    %1984 = vmatpush.msra.mxu0 %v1925
    %1985 = vmatpush.msra.mxu0 %v1924
    %1986 = vmatpush.msra.mxu0 %v1923
    %1987 = vmatpush.msra.mxu0 %v1922
    %1988 = vmatpush.msra.mxu0 %v1921
    %1989 = vmatmul.f32.gmra.mxu0 %v1875
    %v1990 = vpop.f32.mrf.mxu0
    %v1991 = vadd.f32 %v1971, %v1990
    %1992 = vdwg.mxu0
    %v1993 = vld [vmem:[%s6] sm:$0x1]
    %v1995 = vperm.slane %v1993, 0
    %v1997 = vadd.f32 %v1991, %v1995
    %vm1998 = vcmask 23552
    %1999 = vst.msk [vmem:[%s7] sm:$0xff] %vm1998, %v1997
    // Predicated region
    $region38: #{tpu_custom_call.1} parent=1 // pred_check
      _
    $region39: #{tpu_custom_call.1} parent=1 // pred_check_branch
      %2001 = sbr.rel (0) target = $region41
    $region40: #{tpu_custom_call.1} parent=1 // pred_region
      _
    $region41: #{tpu_custom_call.1} parent=1 // pred_fallthru
      _
    // Predicated region
    $region42: #{tpu_custom_call.1} parent=1 // pred_check
      _
    $region43: #{tpu_custom_call.1} parent=1 // pred_check_branch
      %2003 = sbr.rel (0) target = $region45
    $region44: #{tpu_custom_call.1} parent=1 // pred_region
      _
    $region45: #{tpu_custom_call.1} parent=1 // pred_fallthru
      _
    %2004 = vsyncpa [#allocation4], 1
    %2005 = vsyncpa [#allocation6], 1

</llo_original>
